<compile_context>
chip_gen: v6e
topology: v6e:2x2x1
jax: 0.10.0
libtpu: 0.0.40
codegen_flags: <defaults>
</compile_context>

<pallas_src>
import jax
import jax.numpy as jnp
from jax.experimental import pallas as pl
from jax.experimental.pallas import tpu as pltpu

LANES = 128      # vreg lane width
SUBLANES = 8     # vreg sublane count (f32)


def _round_up(x, m):
    return (x + m - 1) // m * m


def _pick_tile_h(H, W, Cp, Cop, operand_bytes, vmem_budget=12 * 1024 * 1024):
    """Largest TH dividing H whose working set fits a conservative VMEM budget.

    Budget (12 MiB) is safe under every generation's default scoped-VMEM limit
    (v5e 16 MiB, v6e 32 MiB, v7x 32 MiB of a 64 MiB part); raise it together
    with CompilerParams(vmem_limit_bytes=...) for bigger tiles on v5e/v6e.
    """
    Wp = _round_up(W + 2, SUBLANES)
    weights_b = 3 * 3 * Cp * Cop * operand_bytes + Cop * 4
    for th in range(H, 0, -1):
        if H % th:
            continue
        in_tile = (th + 2) * Wp * Cp * operand_bytes     # double-buffered input
        out_tile = th * W * Cop * 4                      # double-buffered output
        acc = th * W * Cop * 4                           # f32 scratch accumulator
        if 2 * (in_tile + out_tile) + weights_b + acc <= vmem_budget:
            return th
    return 1


def conv3x3_relu_kernel(x_ref, w_ref, b_ref, o_ref, acc_ref):
    # x_ref:   (1, 1, TH+2, Wp, Cp)   input row-window incl. 1-row halo, channel-padded
    # w_ref:   (3, 3*Cp, Cop)         per-dy weights, dx taps fused along contraction
    # b_ref:   (1, Cop)               bias (f32, channel-padded)
    # o_ref:   (1, 1, TH, W, Cop)     lane-dense output tile
    # acc_ref: (TH*W, Cop) f32        VMEM scratch accumulator
    TH = o_ref.shape[2]
    W = o_ref.shape[3]
    Cp = x_ref.shape[4]
    Cop = o_ref.shape[4]

    # Initialize the accumulator with the broadcast bias (epilogue stays f32).
    acc_ref[...] = jnp.broadcast_to(b_ref[...], (TH * W, Cop)).astype(jnp.float32)

    for dy in range(3):
        # H-slice is on an untiled outer dim -> free.  Upcast once so the
        # dx shifts / concat run on f32 vregs regardless of operand dtype.
        s = x_ref[0, 0, dy:dy + TH].astype(jnp.float32)          # (TH, Wp, Cp)
        # dx taps fused along the contraction dim -> one (TH*W, 3*Cp) slab and a
        # single K=3*Cp matmul per dy instead of 3 tiny K=Cin matmuls.
        # (pltpu.roll(s, Wp-dx, axis=1)[:, :W, :] is an XLU-slot alternative to
        #  these sublane-offset slices if they ever show up hot in the bundle.)
        a = jnp.concatenate(
            [s[:, 0:W, :], s[:, 1:W + 1, :], s[:, 2:W + 2, :]], axis=-1)
        a = a.reshape(TH * W, 3 * Cp).astype(w_ref.dtype)
        acc_ref[...] += jnp.dot(a, w_ref[dy],
                                preferred_element_type=jnp.float32)

    out = jnp.maximum(acc_ref[...], 0.0)                          # ReLU, f32
    o_ref[...] = out.reshape(1, 1, TH, W, Cop).astype(o_ref.dtype)


def conv_relu_block(x_nchw, weight, bias, *, tile_h=None,
                    operand_dtype=jnp.bfloat16):
    """x_nchw: (N, Cin, H, W); weight: (Cout, Cin, 3, 3); bias: (Cout,).

    Returns (N, Cout, H, W), matching PyTorch Conv2d(k=3, s=1, p=1) + ReLU.
    operand_dtype=bf16 uses the bf16 MXU path (f32 accumulation);
    operand_dtype=jnp.float32 reproduces the reference bit-for-bit-close.
    """
    N, Cin, H, W = x_nchw.shape
    Cout = weight.shape[0]
    Cp = _round_up(Cin, LANES)        # lane-dense contraction channels
    Cop = _round_up(Cout, LANES)      # lane-dense output channels
    Wp = _round_up(W + 2, SUBLANES)   # sublane-aligned padded width

    operand_bytes = jnp.dtype(operand_dtype).itemsize
    if tile_h is None:
        tile_h = _pick_tile_h(H, W, Cp, Cop, operand_bytes)
    assert H % tile_h == 0, "tile_h must divide H"
    TH = tile_h
    nH = H // TH

    # ---- layout glue (hoist out of the per-layer path in a real layer stack) ----
    x_nhwc = jnp.transpose(x_nchw, (0, 2, 3, 1))                        # (N, H, W, Cin)
    x_pad = jnp.pad(x_nhwc,
                    ((0, 0), (1, 1), (1, Wp - (W + 1)), (0, Cp - Cin)))  # (N, H+2, Wp, Cp)
    x_pad = x_pad.astype(operand_dtype)
    # Pre-split overlapping row windows (1-row halo top/bottom) so the kernel's
    # BlockSpec stays a plain block index map.
    x_tiles = jnp.stack([x_pad[:, i * TH:i * TH + TH + 2] for i in range(nH)],
                        axis=1)                                          # (N, nH, TH+2, Wp, Cp)

    w_hwio = jnp.transpose(weight, (2, 3, 1, 0))                         # (3, 3, Cin, Cout)
    w_pad = jnp.pad(w_hwio, ((0, 0), (0, 0), (0, Cp - Cin), (0, Cop - Cout)))
    w_fused = w_pad.reshape(3, 3 * Cp, Cop).astype(operand_dtype)        # dx-major fused K

    b_pad = jnp.pad(bias, (0, Cop - Cout)).reshape(1, Cop).astype(jnp.float32)

    out_tiled = pl.pallas_call(
        conv3x3_relu_kernel,
        out_shape=jax.ShapeDtypeStruct((N, nH, TH, W, Cop), x_nchw.dtype),
        grid_spec=pltpu.PrefetchScalarGridSpec(
            num_scalar_prefetch=0,
            grid=(N, nH),
            in_specs=[
                pl.BlockSpec((1, 1, TH + 2, Wp, Cp),
                             lambda n, h: (n, h, 0, 0, 0)),
                pl.BlockSpec((3, 3 * Cp, Cop), lambda n, h: (0, 0, 0)),
                pl.BlockSpec((1, Cop), lambda n, h: (0, 0)),
            ],
            out_specs=pl.BlockSpec((1, 1, TH, W, Cop),
                                   lambda n, h: (n, h, 0, 0, 0)),
            scratch_shapes=[pltpu.VMEM((TH * W, Cop), jnp.float32)],
        ),
        compiler_params=pltpu.CompilerParams(
            # Both axes are independent -> shard across v7x's 2 TensorCores.
            dimension_semantics=("parallel", "parallel")),
    )(x_tiles, w_fused, b_pad)

    out_nhwc = out_tiled.reshape(N, H, W, Cop)[..., :Cout]   # drop Cout padding
    return jnp.transpose(out_nhwc, (0, 3, 1, 2))             # back to NCHW


if __name__ == "__main__":
    # Small shapes consistent with the module.
    N, Cin, Cout, H, W = 2, 4, 8, 16, 16

    key = jax.random.PRNGKey(0)
    kx, kw, kb = jax.random.split(key, 3)
    x = jax.random.normal(kx, (N, Cin, H, W), dtype=jnp.float32)
    # PyTorch parameter shapes: (Cout, Cin, 3, 3), (Cout,).
    weight = jax.random.normal(kw, (Cout, Cin, 3, 3), dtype=jnp.float32) * 0.1
    bias = jax.random.normal(kb, (Cout,), dtype=jnp.float32) * 0.1

    # tile_h=8 exercises the H-tiled (halo) path with 2 row-tiles per image.
    out_f32 = conv_relu_block(x, weight, bias, tile_h=8,
                              operand_dtype=jnp.float32)
    out_bf16 = conv_relu_block(x, weight, bias, tile_h=8,
                               operand_dtype=jnp.bfloat16)
    out_f32, out_bf16 = jax.block_until_ready((out_f32, out_bf16))

    # Reference: XLA conv (NCHW) + ReLU, matching nn.Conv2d(k=3, s=1, p=1) + ReLU.
    ref = jax.lax.conv_general_dilated(
        x, weight, window_strides=(1, 1), padding=((1, 1), (1, 1)),
        dimension_numbers=("NCHW", "OIHW", "NCHW"))
    ref = jnp.maximum(ref + bias.reshape(1, Cout, 1, 1), 0.0)

    assert out_f32.shape == (N, Cout, H, W)
    assert out_bf16.shape == (N, Cout, H, W)
    assert jnp.allclose(out_f32, ref, atol=1e-4, rtol=1e-4), \
        float(jnp.max(jnp.abs(out_f32 - ref)))
    assert jnp.allclose(out_bf16, ref, atol=2e-2, rtol=2e-2), \
        float(jnp.max(jnp.abs(out_bf16 - ref)))
    print("KERNEL_OK")
</pallas_src>

<mosaic_0001>
module attributes {stable_mosaic.version = 11 : i64} {
  func.func @conv3x3_relu_kernel(%arg0: i32, %arg1: i32, %arg2: memref<1x1x10x24x128xf32, #tpu.memory_space<vmem>>, %arg3: memref<3x384x128xf32, #tpu.memory_space<vmem>>, %arg4: memref<1x128xf32, #tpu.memory_space<vmem>>, %arg5: memref<1x1x8x16x128xf32, #tpu.memory_space<vmem>>, %arg6: memref<128x128xf32, #tpu.memory_space<vmem>>) attributes {dimension_semantics = [#tpu.dimension_semantics<parallel>, #tpu.dimension_semantics<parallel>], iteration_bounds = array<i64: 2, 2>, scalar_prefetch = 0 : i64, scratch_operands = 1 : i64, tpu.core_type = #tpu.core_type<tc>, window_params = [{transform_indices = @transform_0, window_bounds = array<i64: 1, 1, 10, 24, 128>}, {pipeline_mode = #tpu.pipeline_mode<synchronous>, transform_indices = @transform_1, window_bounds = array<i64: 3, 384, 128>}, {pipeline_mode = #tpu.pipeline_mode<synchronous>, transform_indices = @transform_2, window_bounds = array<i64: 1, 128>}, {transform_indices = @transform_3, window_bounds = array<i64: 1, 1, 8, 16, 128>}]} {
    %c0 = arith.constant 0 : index
    %c0_0 = arith.constant 0 : index
    %0 = vector.load %arg4[%c0, %c0_0] : memref<1x128xf32, #tpu.memory_space<vmem>>, vector<1x128xf32>
    %1 = vector.shape_cast %0 : vector<1x128xf32> to vector<1x128xf32>
    %2 = vector.broadcast %1 : vector<1x128xf32> to vector<128x128xf32>
    %c0_1 = arith.constant 0 : index
    %c0_2 = arith.constant 0 : index
    %3 = vector.load %arg6[%c0_1, %c0_2] : memref<128x128xf32, #tpu.memory_space<vmem>>, vector<128x128xf32>
    tpu.vector_store %arg6[%c0_1, %c0_2], %2 {strides = array<i32>} : memref<128x128xf32, #tpu.memory_space<vmem>>, vector<128x128xf32>,
    %c0_3 = arith.constant 0 : index
    %c0_4 = arith.constant 0 : index
    %c0_5 = arith.constant 0 : index
    %c0_6 = arith.constant 0 : index
    %c0_7 = arith.constant 0 : index
    %4 = vector.load %arg2[%c0_3, %c0_4, %c0_5, %c0_6, %c0_7] : memref<1x1x10x24x128xf32, #tpu.memory_space<vmem>>, vector<1x1x8x24x128xf32>
    %5 = vector.shape_cast %4 : vector<1x1x8x24x128xf32> to vector<8x24x128xf32>
    %6 = vector.extract_strided_slice %5 {offsets = [0, 0, 0], sizes = [8, 16, 128], strides = [1, 1, 1]} : vector<8x24x128xf32> to vector<8x16x128xf32>
    %7 = vector.extract_strided_slice %5 {offsets = [0, 1, 0], sizes = [8, 16, 128], strides = [1, 1, 1]} : vector<8x24x128xf32> to vector<8x16x128xf32>
    %8 = vector.extract_strided_slice %5 {offsets = [0, 2, 0], sizes = [8, 16, 128], strides = [1, 1, 1]} : vector<8x24x128xf32> to vector<8x16x128xf32>
    %9 = tpu.concatenate %6, %7, %8 in 2 : vector<8x16x128xf32>, vector<8x16x128xf32>, vector<8x16x128xf32> -> vector<8x16x384xf32>
    %10 = vector.shape_cast %9 : vector<8x16x384xf32> to vector<128x384xf32>
    %c0_8 = arith.constant 0 : index
    %c0_9 = arith.constant 0 : index
    %11 = vector.load %arg6[%c0_8, %c0_9] : memref<128x128xf32, #tpu.memory_space<vmem>>, vector<128x128xf32>
    %c0_10 = arith.constant 0 : index
    %c0_11 = arith.constant 0 : index
    %c0_12 = arith.constant 0 : index
    %12 = vector.load %arg3[%c0_10, %c0_11, %c0_12] : memref<3x384x128xf32, #tpu.memory_space<vmem>>, vector<1x384x128xf32>
    %13 = vector.shape_cast %12 : vector<1x384x128xf32> to vector<384x128xf32>
    %cst = arith.constant dense<0.000000e+00> : vector<128x128xf32>
    %14 = tpu.matmul %10, %13, %cst {dimension_numbers = #tpu.dot_dimension_numbers<[1], [0], [0], [1], [0, 0, 1, 1], [], []>} : vector<128x384xf32>, vector<384x128xf32>, vector<128x128xf32> -> vector<128x128xf32>
    %15 = arith.addf %11, %14 : vector<128x128xf32>
    %c0_13 = arith.constant 0 : index
    %c0_14 = arith.constant 0 : index
    %16 = vector.load %arg6[%c0_13, %c0_14] : memref<128x128xf32, #tpu.memory_space<vmem>>, vector<128x128xf32>
    tpu.vector_store %arg6[%c0_13, %c0_14], %15 {strides = array<i32>} : memref<128x128xf32, #tpu.memory_space<vmem>>, vector<128x128xf32>,
    %c0_15 = arith.constant 0 : index
    %c0_16 = arith.constant 0 : index
    %c1 = arith.constant 1 : index
    %c0_17 = arith.constant 0 : index
    %c0_18 = arith.constant 0 : index
    %17 = vector.load %arg2[%c0_15, %c0_16, %c1, %c0_17, %c0_18] : memref<1x1x10x24x128xf32, #tpu.memory_space<vmem>>, vector<1x1x8x24x128xf32>
    %18 = vector.shape_cast %17 : vector<1x1x8x24x128xf32> to vector<8x24x128xf32>
    %19 = vector.extract_strided_slice %18 {offsets = [0, 0, 0], sizes = [8, 16, 128], strides = [1, 1, 1]} : vector<8x24x128xf32> to vector<8x16x128xf32>
    %20 = vector.extract_strided_slice %18 {offsets = [0, 1, 0], sizes = [8, 16, 128], strides = [1, 1, 1]} : vector<8x24x128xf32> to vector<8x16x128xf32>
    %21 = vector.extract_strided_slice %18 {offsets = [0, 2, 0], sizes = [8, 16, 128], strides = [1, 1, 1]} : vector<8x24x128xf32> to vector<8x16x128xf32>
    %22 = tpu.concatenate %19, %20, %21 in 2 : vector<8x16x128xf32>, vector<8x16x128xf32>, vector<8x16x128xf32> -> vector<8x16x384xf32>
    %23 = vector.shape_cast %22 : vector<8x16x384xf32> to vector<128x384xf32>
    %c0_19 = arith.constant 0 : index
    %c0_20 = arith.constant 0 : index
    %24 = vector.load %arg6[%c0_19, %c0_20] : memref<128x128xf32, #tpu.memory_space<vmem>>, vector<128x128xf32>
    %c1_21 = arith.constant 1 : index
    %c0_22 = arith.constant 0 : index
    %c0_23 = arith.constant 0 : index
    %25 = vector.load %arg3[%c1_21, %c0_22, %c0_23] : memref<3x384x128xf32, #tpu.memory_space<vmem>>, vector<1x384x128xf32>
    %26 = vector.shape_cast %25 : vector<1x384x128xf32> to vector<384x128xf32>
    %cst_24 = arith.constant dense<0.000000e+00> : vector<128x128xf32>
    %27 = tpu.matmul %23, %26, %cst_24 {dimension_numbers = #tpu.dot_dimension_numbers<[1], [0], [0], [1], [0, 0, 1, 1], [], []>} : vector<128x384xf32>, vector<384x128xf32>, vector<128x128xf32> -> vector<128x128xf32>
    %28 = arith.addf %24, %27 : vector<128x128xf32>
    %c0_25 = arith.constant 0 : index
    %c0_26 = arith.constant 0 : index
    %29 = vector.load %arg6[%c0_25, %c0_26] : memref<128x128xf32, #tpu.memory_space<vmem>>, vector<128x128xf32>
    tpu.vector_store %arg6[%c0_25, %c0_26], %28 {strides = array<i32>} : memref<128x128xf32, #tpu.memory_space<vmem>>, vector<128x128xf32>,
    %c0_27 = arith.constant 0 : index
    %c0_28 = arith.constant 0 : index
    %c2 = arith.constant 2 : index
    %c0_29 = arith.constant 0 : index
    %c0_30 = arith.constant 0 : index
    %30 = vector.load %arg2[%c0_27, %c0_28, %c2, %c0_29, %c0_30] : memref<1x1x10x24x128xf32, #tpu.memory_space<vmem>>, vector<1x1x8x24x128xf32>
    %31 = vector.shape_cast %30 : vector<1x1x8x24x128xf32> to vector<8x24x128xf32>
    %32 = vector.extract_strided_slice %31 {offsets = [0, 0, 0], sizes = [8, 16, 128], strides = [1, 1, 1]} : vector<8x24x128xf32> to vector<8x16x128xf32>
    %33 = vector.extract_strided_slice %31 {offsets = [0, 1, 0], sizes = [8, 16, 128], strides = [1, 1, 1]} : vector<8x24x128xf32> to vector<8x16x128xf32>
    %34 = vector.extract_strided_slice %31 {offsets = [0, 2, 0], sizes = [8, 16, 128], strides = [1, 1, 1]} : vector<8x24x128xf32> to vector<8x16x128xf32>
    %35 = tpu.concatenate %32, %33, %34 in 2 : vector<8x16x128xf32>, vector<8x16x128xf32>, vector<8x16x128xf32> -> vector<8x16x384xf32>
    %36 = vector.shape_cast %35 : vector<8x16x384xf32> to vector<128x384xf32>
    %c0_31 = arith.constant 0 : index
    %c0_32 = arith.constant 0 : index
    %37 = vector.load %arg6[%c0_31, %c0_32] : memref<128x128xf32, #tpu.memory_space<vmem>>, vector<128x128xf32>
    %c2_33 = arith.constant 2 : index
    %c0_34 = arith.constant 0 : index
    %c0_35 = arith.constant 0 : index
    %38 = vector.load %arg3[%c2_33, %c0_34, %c0_35] : memref<3x384x128xf32, #tpu.memory_space<vmem>>, vector<1x384x128xf32>
    %39 = vector.shape_cast %38 : vector<1x384x128xf32> to vector<384x128xf32>
    %cst_36 = arith.constant dense<0.000000e+00> : vector<128x128xf32>
    %40 = tpu.matmul %36, %39, %cst_36 {dimension_numbers = #tpu.dot_dimension_numbers<[1], [0], [0], [1], [0, 0, 1, 1], [], []>} : vector<128x384xf32>, vector<384x128xf32>, vector<128x128xf32> -> vector<128x128xf32>
    %41 = arith.addf %37, %40 : vector<128x128xf32>
    %c0_37 = arith.constant 0 : index
    %c0_38 = arith.constant 0 : index
    %42 = vector.load %arg6[%c0_37, %c0_38] : memref<128x128xf32, #tpu.memory_space<vmem>>, vector<128x128xf32>
    tpu.vector_store %arg6[%c0_37, %c0_38], %41 {strides = array<i32>} : memref<128x128xf32, #tpu.memory_space<vmem>>, vector<128x128xf32>,
    %c0_39 = arith.constant 0 : index
    %c0_40 = arith.constant 0 : index
    %43 = vector.load %arg6[%c0_39, %c0_40] : memref<128x128xf32, #tpu.memory_space<vmem>>, vector<128x128xf32>
    %cst_41 = arith.constant 0.000000e+00 : f32
    %44 = vector.broadcast %cst_41 : f32 to vector<128x128xf32>
    %45 = arith.maximumf %43, %44 : vector<128x128xf32>
    %46 = vector.shape_cast %45 : vector<128x128xf32> to vector<1x1x8x16x128xf32>
    %c0_42 = arith.constant 0 : index
    %c0_43 = arith.constant 0 : index
    %c0_44 = arith.constant 0 : index
    %c0_45 = arith.constant 0 : index
    %c0_46 = arith.constant 0 : index
    %47 = vector.load %arg5[%c0_42, %c0_43, %c0_44, %c0_45, %c0_46] : memref<1x1x8x16x128xf32, #tpu.memory_space<vmem>>, vector<1x1x8x16x128xf32>
    tpu.vector_store %arg5[%c0_42, %c0_43, %c0_44, %c0_45, %c0_46], %46 {strides = array<i32>} : memref<1x1x8x16x128xf32, #tpu.memory_space<vmem>>, vector<1x1x8x16x128xf32>,
    return
  }
  func.func @transform_0(%arg0: i32, %arg1: i32) -> (i32, i32, i32, i32, i32) {
    %c0_i32 = arith.constant 0 : i32
    %c0_i32_0 = arith.constant 0 : i32
    %c0_i32_1 = arith.constant 0 : i32
    %c0_i32_2 = arith.constant 0 : i32
    return %arg0, %arg1, %c0_i32, %c0_i32_0, %c0_i32_1 : i32, i32, i32, i32, i32
  }
  func.func @transform_1(%arg0: i32, %arg1: i32) -> (i32, i32, i32) {
    %c0_i32 = arith.constant 0 : i32
    %c0_i32_0 = arith.constant 0 : i32
    %c0_i32_1 = arith.constant 0 : i32
    %c0_i32_2 = arith.constant 0 : i32
    return %c0_i32, %c0_i32_0, %c0_i32_1 : i32, i32, i32
  }
  func.func @transform_2(%arg0: i32, %arg1: i32) -> (i32, i32) {
    %c0_i32 = arith.constant 0 : i32
    %c0_i32_0 = arith.constant 0 : i32
    %c0_i32_1 = arith.constant 0 : i32
    return %c0_i32, %c0_i32_0 : i32, i32
  }
  func.func @transform_3(%arg0: i32, %arg1: i32) -> (i32, i32, i32, i32, i32) {
    %c0_i32 = arith.constant 0 : i32
    %c0_i32_0 = arith.constant 0 : i32
    %c0_i32_1 = arith.constant 0 : i32
    %c0_i32_2 = arith.constant 0 : i32
    return %arg0, %arg1, %c0_i32, %c0_i32_0, %c0_i32_1 : i32, i32, i32, i32, i32
  }
}

</mosaic_0001>

<llo_original>
// kernel: tpu_custom_call.1
$region0: #{tpu_custom_call.1}
  #allocation0 [shape = 'u32[]', space=smem, size = 0x4, offset = 0x4, fixed_abs, tag = 'smem constant byte address 0x4 - core index']
  #allocation1 [shape = 'u32[144,128]{1,0:T(1,128)}', space=vmem, size = 0x12000, scoped, tag = 'internal scratch']
  #allocation2 [shape = 'f32[128,128]{1,0:T(8,128)}', space=vmem, size = 0x10000, scoped, tag = 'scratch operand']
  %s0 = inlined_call_operand.hbm [shape: f32[2,2,10,24,128], index: 0, kind: input, shape index: {}]
  %s1 = inlined_call_operand.hbm [shape: f32[3,384,128], index: 1, kind: input, shape index: {}]
  %s2 = inlined_call_operand.vmem [shape: f32[1,128], index: 2, kind: input, shape index: {}]
  %s3 = inlined_call_operand.hbm [shape: f32[2,2,8,16,128], index: 3, kind: output, shape index: {}]
  %s4 = sld [smem:[#allocation0]]
  $region53: #{tpu_custom_call.1} parent=0
    _
  %s6 = ssub.s32 1, %s4
  %s7 = scalar_select 0, %s6, %s4
  $region1: #{tpu_custom_call.1} parent=0
    #allocation3 [shape = 'u8[245760]{0}', space=vmem, size = 0x3c000, scoped, tag = 'input window, operand 0']
    #allocation4 [shape = 's32[2]{0}', space=sflag, size = 0x8, scoped, tag = 'scoped memory for tpu_custom_call.1']
    #allocation5 [shape = 's32[2]{0}', space=sflag, size = 0x8, scoped, tag = 'scoped memory for tpu_custom_call.1']
    #allocation6 [shape = 'u8[589824]{0}', space=vmem, size = 0x90000, scoped, tag = 'input window, operand 1, single buffered']
    #allocation7 [shape = 's32[1]{0}', space=sflag, size = 0x4, scoped, tag = 'scoped memory for tpu_custom_call.1']
    #allocation8 [shape = 'u8[131072]{0}', space=vmem, size = 0x20000, scoped, tag = 'output window, operand 0']
    %8 = vsyncpa [#allocation4], 0
    %s9 = scalar_lea.sflag [#allocation4], 1
    %10 = vsyncpa %s9, 0
    %11 = vsyncpa [#allocation7], 0
    %12 = vsyncpa [#allocation5], 0
    %s13 = scalar_lea.sflag [#allocation5], 1
    %14 = vsyncpa %s13, 0
    loop: start=0, step=1, limit=6
    $region2: #{tpu_custom_call.1} parent=1 // loop_pre_header
      _
    $region3: #{tpu_custom_call.1} parent=1 // loop_header
      %s16 = sphi 0, %s20
      %p17 = scmp.ge.s32.totalorder %s16, 6
      %s23 = sphi 0, %s35
      %s24 = sphi 0, %s31
      %s25 = sphi 0, %s23
      %s26 = sphi 0, %s24
      %s27 = sphi 0, %s25
      %s28 = sphi 0, %s26
      %s40 = sphi 0, %s42
      %s43 = sphi 0, %s40
      %s44 = sphi 0, %s43
      %s60 = sphi 0, %s44
      %s64 = sphi 0, %s64
      %s66 = sphi 0, %s64
      %s67 = sphi 0, %s66
      %s81 = sphi 0, %s67
      %s85 = sphi 0, %s85
      %s87 = sphi 0, %s85
      %s88 = sphi 0, %s87
      %s102 = sphi 0, %s88
      %s110 = sphi 0, %s112
      %s113 = sphi 0, %s110
      %s114 = sphi 0, %s113
      %s130 = sphi 0, %s114
    $region4: #{tpu_custom_call.1} parent=1 // loop_header_branch
      %19 = sbr.rel (%p17) target = $region8
    $region5: #{tpu_custom_call.1} parent=1 // loop_body
      %s21 = ssub.s32 %s16, 1
      %s22 = ssub.s32 %s16, 2
      %s29 = sadd.s32 1, %s24
      %p30 = scmp.ge.s32.totalorder %s29, 2
      %s31 = scalar_select %p30, 0, %s29
      %s32 = sadd.s32 1, %s23
      %s33 = scalar_select %p30, %s32, %s23
      %p34 = scmp.ge.s32.totalorder %s33, 2
      %s35 = scalar_select %p34, 0, %s33
      %s36 = ssub.s32 %s23, %s35
      %s37 = ssub.s32 %s24, %s31
      %s38 = sor.u32 %s36, %s37
      %p39 = scmp.eq.s32.totalorder %s38, 0
      %s41 = sadd.s32 %s40, 1
      %s42 = scalar_select %p39, %s40, %s41
      %p45 = pneg %p39
      %p46 = scmp.eq.s32.totalorder %s16, 3
      %p47 = por %p45, %p46
      %p48 = scmp.ne.s32.totalorder %s40, %s43
      %p49 = scmp.eq.s32.totalorder %s16, 0
      %p50 = por %p48, %p49
      %p51 = scmp.ne.s32.totalorder %s40, %s43
      %p52 = scmp.eq.s32.totalorder %s21, 3
      %p53 = por %p51, %p52
      %p54 = scmp.ne.s32.totalorder %s43, %s44
      %p55 = scmp.eq.s32.totalorder %s21, 0
      %p56 = por %p54, %p55
      %p57 = scmp.ne.s32.totalorder %s43, %s44
      %p58 = scmp.eq.s32.totalorder %s22, 3
      %p59 = por %p57, %p58
      %p61 = scmp.ne.s32.totalorder %s44, %s60
      %p62 = scmp.eq.s32.totalorder %s22, 0
      %p63 = por %p61, %p62
      %s65 = sadd.s32 %s64, 1
      %p68 = scmp.eq.s32.totalorder %s16, 3
      %p69 = scmp.ne.s32.totalorder %s64, %s66
      %p70 = scmp.eq.s32.totalorder %s16, 0
      %p71 = por %p69, %p70
      %p72 = scmp.ne.s32.totalorder %s64, %s66
      %p73 = scmp.eq.s32.totalorder %s21, 3
      %p74 = por %p72, %p73
      %p75 = scmp.ne.s32.totalorder %s66, %s67
      %p76 = scmp.eq.s32.totalorder %s21, 0
      %p77 = por %p75, %p76
      %p78 = scmp.ne.s32.totalorder %s66, %s67
      %p79 = scmp.eq.s32.totalorder %s22, 3
      %p80 = por %p78, %p79
      %p82 = scmp.ne.s32.totalorder %s67, %s81
      %p83 = scmp.eq.s32.totalorder %s22, 0
      %p84 = por %p82, %p83
      %s86 = sadd.s32 %s85, 1
      %p89 = scmp.eq.s32.totalorder %s16, 3
      %p90 = scmp.ne.s32.totalorder %s85, %s87
      %p91 = scmp.eq.s32.totalorder %s16, 0
      %p92 = por %p90, %p91
      %p93 = scmp.ne.s32.totalorder %s85, %s87
      %p94 = scmp.eq.s32.totalorder %s21, 3
      %p95 = por %p93, %p94
      %p96 = scmp.ne.s32.totalorder %s87, %s88
      %p97 = scmp.eq.s32.totalorder %s21, 0
      %p98 = por %p96, %p97
      %p99 = scmp.ne.s32.totalorder %s87, %s88
      %p100 = scmp.eq.s32.totalorder %s22, 3
      %p101 = por %p99, %p100
      %p103 = scmp.ne.s32.totalorder %s88, %s102
      %p104 = scmp.eq.s32.totalorder %s22, 0
      %p105 = por %p103, %p104
      %s106 = ssub.s32 %s23, %s35
      %s107 = ssub.s32 %s24, %s31
      %s108 = sor.u32 %s106, %s107
      %p109 = scmp.eq.s32.totalorder %s108, 0
      %s111 = sadd.s32 %s110, 1
      %s112 = scalar_select %p109, %s110, %s111
      %p115 = pneg %p109
      %p116 = scmp.eq.s32.totalorder %s16, 3
      %p117 = por %p115, %p116
      %p118 = scmp.ne.s32.totalorder %s110, %s113
      %p119 = scmp.eq.s32.totalorder %s16, 0
      %p120 = por %p118, %p119
      %p121 = scmp.ne.s32.totalorder %s110, %s113
      %p122 = scmp.eq.s32.totalorder %s21, 3
      %p123 = por %p121, %p122
      %p124 = scmp.ne.s32.totalorder %s113, %s114
      %p125 = scmp.eq.s32.totalorder %s21, 0
      %p126 = por %p124, %p125
      %p127 = scmp.ne.s32.totalorder %s113, %s114
      %p128 = scmp.eq.s32.totalorder %s22, 3
      %p129 = por %p127, %p128
      %p131 = scmp.ne.s32.totalorder %s114, %s130
      %p132 = scmp.eq.s32.totalorder %s22, 0
      %p133 = por %p131, %p132
      %p134 = scmp.le.s32.totalorder 1, %s16
      %p135 = scmp.lt.s32.totalorder %s16, 5
      %p136 = pnand %p134, %p135
      %p137 = pneg %p136
      // Predicated region
      $region9: #{tpu_custom_call.1} parent=5 // pred_check
        _
      $region10: #{tpu_custom_call.1} parent=5 // pred_check_branch
        %139 = sbr.rel (%p136) target = $region12
      $region11: #{tpu_custom_call.1} parent=5 // pred_region
        %s140 = ssub.s32 %s16, 1
        // Predicated region
        $region13: #{tpu_custom_call.1} parent=11 // pred_check
          %p141 = pneg %p77
        $region14: #{tpu_custom_call.1} parent=11 // pred_check_branch
          %143 = sbr.rel (%p141) target = $region16
        $region15: #{tpu_custom_call.1} parent=11 // pred_region
          %s145 = ssub.s32 18432, 18432
          %146 = vsyncadd [#allocation7], %s145
          %s147 = sshll.u32 [#allocation6], 4
          %s148 = int_to_ptr.vmem [resolvable:$true] %s147
          %153 = dma.hbm_to_vmem [thread:$0]  %s1, 18432, %s148, [#allocation7], 128, 128, 8
        $region16: #{tpu_custom_call.1} parent=11 // pred_fallthru
          _
        // Predicated region
        $region17: #{tpu_custom_call.1} parent=11 // pred_check
          %p154 = pneg %p98
        $region18: #{tpu_custom_call.1} parent=11 // pred_check_branch
          %156 = sbr.rel (%p154) target = $region20
        $region19: #{tpu_custom_call.1} parent=11 // pred_region
          _
        $region20: #{tpu_custom_call.1} parent=11 // pred_fallthru
          _
      $region12: #{tpu_custom_call.1} parent=5 // pred_fallthru
        _
      %p157 = scmp.lt.s32.totalorder %s16, 4
      // Predicated region
      $region21: #{tpu_custom_call.1} parent=5 // pred_check
        %p158 = pneg %p157
      $region22: #{tpu_custom_call.1} parent=5 // pred_check_branch
        %160 = sbr.rel (%p158) target = $region24
      $region23: #{tpu_custom_call.1} parent=5 // pred_region
        // Predicated region
        $region25: #{tpu_custom_call.1} parent=23 // pred_check
          %p161 = pneg %p50
        $region26: #{tpu_custom_call.1} parent=23 // pred_check_branch
          %163 = sbr.rel (%p161) target = $region28
        $region27: #{tpu_custom_call.1} parent=23 // pred_region
          %s164 = sand.u32 %s40, 1
          %s165 = scalar_lea.sflag [#allocation4], %s164
          %s166 = sand.u32 %s40, 1
          %s167 = smul.addr %s166, 240
          %s168 = scalar_lea.vmem [#allocation3], %s167
          %s170 = ssub.s32 3840, 3840
          %171 = vsyncadd %s165, %s170
          %s172 = smul.addr %s24, 30
          %s173 = smul.addr %s23, 60
          %s174 = sadd.s32 %s172, %s173
          %s175 = smul.addr %s174, 128
          %s176 = scalar_lea.hbm %s0, %s175
          %s177 = sshll.u32 %s168, 4
          %s178 = int_to_ptr.vmem [resolvable:$true] %s177
          %183 = dma.hbm_to_vmem [thread:$0]  %s176, 3840, %s178, %s165, 128, 128, 8
        $region28: #{tpu_custom_call.1} parent=23 // pred_fallthru
          _
      $region24: #{tpu_custom_call.1} parent=5 // pred_fallthru
        _
      %p184 = scmp.le.s32.totalorder 1, %s16
      %p185 = scmp.lt.s32.totalorder %s16, 5
      %p186 = pnand %p184, %p185
      %p187 = pneg %p186
      // Predicated region
      $region29: #{tpu_custom_call.1} parent=5 // pred_check
        _
      $region30: #{tpu_custom_call.1} parent=5 // pred_check_branch
        %189 = sbr.rel (%p186) target = $region32
      $region31: #{tpu_custom_call.1} parent=5 // pred_region
        %s190 = ssub.s32 %s16, 1
        %s191 = sand.u32 %s43, 1
        %s192 = scalar_lea.sflag [#allocation4], %s191
        %s193 = sand.u32 %s43, 1
        %s194 = smul.addr %s193, 240
        %s195 = scalar_lea.vmem [#allocation3], %s194
        // Predicated region
        $region33: #{tpu_custom_call.1} parent=31 // pred_check
          %p196 = pneg %p56
        $region34: #{tpu_custom_call.1} parent=31 // pred_check_branch
          %198 = sbr.rel (%p196) target = $region36
        $region35: #{tpu_custom_call.1} parent=31 // pred_region
          %199 = dma.done %s192, 3840
        $region36: #{tpu_custom_call.1} parent=31 // pred_fallthru
          _
        // Predicated region
        $region37: #{tpu_custom_call.1} parent=31 // pred_check
          %p200 = pneg %p77
        $region38: #{tpu_custom_call.1} parent=31 // pred_check_branch
          %202 = sbr.rel (%p200) target = $region40
        $region39: #{tpu_custom_call.1} parent=31 // pred_region
          %203 = dma.done [#allocation7], 18432
        $region40: #{tpu_custom_call.1} parent=31 // pred_fallthru
          _
        %s204 = sand.u32 %s43, 1
        %s205 = scalar_lea.sflag [#allocation4], %s204
        %s206 = sand.u32 %s43, 1
        %s207 = smul.addr %s206, 240
        %s208 = scalar_lea.vmem [#allocation3], %s207
        %p209 = pneg %p56
        %p210 = pneg %p53
        %p211 = pneg %p77
        %p212 = pneg %p74
        %p213 = pneg %p98
        %p214 = pneg %p95
        %p215 = pneg %p126
        %p216 = pneg %p123
        %s217 = sand.u32 %s113, 1
        %s218 = scalar_lea.sflag [#allocation5], %s217
        %s219 = sand.u32 %s113, 1
        %s220 = smul.addr %s219, 128
        %s221 = scalar_lea.vmem [#allocation8], %s220
        %v222 = vld [vmem:[%s2] sm:$0x1]
        %v224 = vlaneseq
        %v225 = vshrl.u32 %v224, 7
        %v226 = vsub.s32 0, %v225
        %v227 = vrot.slane %v222, %v226
        %229 = vst [vmem:[#allocation2] sm:$0xff] %v227
        %230 = vst [vmem:[#allocation2 + $0x8] sm:$0xff] %v227
        %231 = vst [vmem:[#allocation2 + $0x10] sm:$0xff] %v227
        %232 = vst [vmem:[#allocation2 + $0x18] sm:$0xff] %v227
        %233 = vst [vmem:[#allocation2 + $0x20] sm:$0xff] %v227
        %234 = vst [vmem:[#allocation2 + $0x28] sm:$0xff] %v227
        %235 = vst [vmem:[#allocation2 + $0x30] sm:$0xff] %v227
        %236 = vst [vmem:[#allocation2 + $0x38] sm:$0xff] %v227
        %237 = vst [vmem:[#allocation2 + $0x40] sm:$0xff] %v227
        %238 = vst [vmem:[#allocation2 + $0x48] sm:$0xff] %v227
        %239 = vst [vmem:[#allocation2 + $0x50] sm:$0xff] %v227
        %240 = vst [vmem:[#allocation2 + $0x58] sm:$0xff] %v227
        %241 = vst [vmem:[#allocation2 + $0x60] sm:$0xff] %v227
        %242 = vst [vmem:[#allocation2 + $0x68] sm:$0xff] %v227
        %243 = vst [vmem:[#allocation2 + $0x70] sm:$0xff] %v227
        %244 = vst [vmem:[#allocation2 + $0x78] sm:$0xff] %v227
        %v245 = vld [vmem:[%s195] sm:$0xff]
        %v246 = vld [vmem:[%s195 + $0x8] sm:$0xff]
        %v247 = vld [vmem:[%s195 + $0x10] sm:$0xff]
        %v248 = vld [vmem:[%s195 + $0x18] sm:$0xff]
        %v249 = vld [vmem:[%s195 + $0x20] sm:$0xff]
        %v250 = vld [vmem:[%s195 + $0x28] sm:$0xff]
        %v251 = vld [vmem:[%s195 + $0x30] sm:$0xff]
        %v252 = vld [vmem:[%s195 + $0x38] sm:$0xff]
        %v253 = vld [vmem:[%s195 + $0x40] sm:$0xff]
        %v254 = vld [vmem:[%s195 + $0x48] sm:$0xff]
        %v255 = vld [vmem:[%s195 + $0x50] sm:$0xff]
        %v256 = vld [vmem:[%s195 + $0x58] sm:$0xff]
        %v257 = vld [vmem:[%s195 + $0x60] sm:$0xff]
        %v258 = vld [vmem:[%s195 + $0x68] sm:$0xff]
        %v259 = vld [vmem:[%s195 + $0x70] sm:$0xff]
        %v260 = vld [vmem:[%s195 + $0x78] sm:$0xff]
        %v261 = vld [vmem:[%s195 + $0x80] sm:$0xff]
        %v262 = vld [vmem:[%s195 + $0x88] sm:$0xff]
        %v263 = vld [vmem:[%s195 + $0x90] sm:$0xff]
        %v264 = vld [vmem:[%s195 + $0x98] sm:$0xff]
        %v265 = vld [vmem:[%s195 + $0xa0] sm:$0xff]
        %v266 = vld [vmem:[%s195 + $0xa8] sm:$0xff]
        %v267 = vld [vmem:[%s195 + $0xb0] sm:$0xff]
        %v268 = vld [vmem:[%s195 + $0xb8] sm:$0xff]
        %vm293 = vcmask 1046528
        %v294 = vrot.slane %v245, 1
        %v295 = vrot.slane %v246, 1
        %v296 = vsel %vm293, %v294, %v295
        %v297 = vrot.slane %v247, 1
        %v298 = vsel %vm293, %v295, %v297
        %v299 = vrot.slane %v248, 1
        %v300 = vrot.slane %v249, 1
        %v301 = vsel %vm293, %v299, %v300
        %v302 = vrot.slane %v250, 1
        %v303 = vsel %vm293, %v300, %v302
        %v304 = vrot.slane %v251, 1
        %v305 = vrot.slane %v252, 1
        %v306 = vsel %vm293, %v304, %v305
        %v307 = vrot.slane %v253, 1
        %v308 = vsel %vm293, %v305, %v307
        %v309 = vrot.slane %v254, 1
        %v310 = vrot.slane %v255, 1
        %v311 = vsel %vm293, %v309, %v310
        %v312 = vrot.slane %v256, 1
        %v313 = vsel %vm293, %v310, %v312
        %v314 = vrot.slane %v257, 1
        %v315 = vrot.slane %v258, 1
        %v316 = vsel %vm293, %v314, %v315
        %v317 = vrot.slane %v259, 1
        %v318 = vsel %vm293, %v315, %v317
        %v319 = vrot.slane %v260, 1
        %v320 = vrot.slane %v261, 1
        %v321 = vsel %vm293, %v319, %v320
        %v322 = vrot.slane %v262, 1
        %v323 = vsel %vm293, %v320, %v322
        %v324 = vrot.slane %v263, 1
        %v325 = vrot.slane %v264, 1
        %v326 = vsel %vm293, %v324, %v325
        %v327 = vrot.slane %v265, 1
        %v328 = vsel %vm293, %v325, %v327
        %v329 = vrot.slane %v266, 1
        %v330 = vrot.slane %v267, 1
        %v331 = vsel %vm293, %v329, %v330
        %v332 = vrot.slane %v268, 1
        %v333 = vsel %vm293, %v330, %v332
        %vm350 = vcmask 1045504
        %v351 = vrot.slane %v245, 2
        %v352 = vrot.slane %v246, 2
        %v353 = vsel %vm350, %v351, %v352
        %v354 = vrot.slane %v247, 2
        %v355 = vsel %vm350, %v352, %v354
        %v356 = vrot.slane %v248, 2
        %v357 = vrot.slane %v249, 2
        %v358 = vsel %vm350, %v356, %v357
        %v359 = vrot.slane %v250, 2
        %v360 = vsel %vm350, %v357, %v359
        %v361 = vrot.slane %v251, 2
        %v362 = vrot.slane %v252, 2
        %v363 = vsel %vm350, %v361, %v362
        %v364 = vrot.slane %v253, 2
        %v365 = vsel %vm350, %v362, %v364
        %v366 = vrot.slane %v254, 2
        %v367 = vrot.slane %v255, 2
        %v368 = vsel %vm350, %v366, %v367
        %v369 = vrot.slane %v256, 2
        %v370 = vsel %vm350, %v367, %v369
        %v371 = vrot.slane %v257, 2
        %v372 = vrot.slane %v258, 2
        %v373 = vsel %vm350, %v371, %v372
        %v374 = vrot.slane %v259, 2
        %v375 = vsel %vm350, %v372, %v374
        %v376 = vrot.slane %v260, 2
        %v377 = vrot.slane %v261, 2
        %v378 = vsel %vm350, %v376, %v377
        %v379 = vrot.slane %v262, 2
        %v380 = vsel %vm350, %v377, %v379
        %v381 = vrot.slane %v263, 2
        %v382 = vrot.slane %v264, 2
        %v383 = vsel %vm350, %v381, %v382
        %v384 = vrot.slane %v265, 2
        %v385 = vsel %vm350, %v382, %v384
        %v386 = vrot.slane %v266, 2
        %v387 = vrot.slane %v267, 2
        %v388 = vsel %vm350, %v386, %v387
        %v389 = vrot.slane %v268, 2
        %v390 = vsel %vm350, %v387, %v389
        %v407 = vld [vmem:[#allocation2] sm:$0xff]
        %v408 = vld [vmem:[#allocation2 + $0x8] sm:$0xff]
        %v409 = vld [vmem:[#allocation2 + $0x10] sm:$0xff]
        %v410 = vld [vmem:[#allocation2 + $0x18] sm:$0xff]
        %v411 = vld [vmem:[#allocation2 + $0x20] sm:$0xff]
        %v412 = vld [vmem:[#allocation2 + $0x28] sm:$0xff]
        %v413 = vld [vmem:[#allocation2 + $0x30] sm:$0xff]
        %v414 = vld [vmem:[#allocation2 + $0x38] sm:$0xff]
        %v415 = vld [vmem:[#allocation2 + $0x40] sm:$0xff]
        %v416 = vld [vmem:[#allocation2 + $0x48] sm:$0xff]
        %v417 = vld [vmem:[#allocation2 + $0x50] sm:$0xff]
        %v418 = vld [vmem:[#allocation2 + $0x58] sm:$0xff]
        %v419 = vld [vmem:[#allocation2 + $0x60] sm:$0xff]
        %v420 = vld [vmem:[#allocation2 + $0x68] sm:$0xff]
        %v421 = vld [vmem:[#allocation2 + $0x70] sm:$0xff]
        %v422 = vld [vmem:[#allocation2 + $0x78] sm:$0xff]
        %v423 = vld [vmem:[#allocation6] sm:$0xff]
        %v424 = vld [vmem:[#allocation6 + $0x8] sm:$0xff]
        %v425 = vld [vmem:[#allocation6 + $0x10] sm:$0xff]
        %v426 = vld [vmem:[#allocation6 + $0x18] sm:$0xff]
        %v427 = vld [vmem:[#allocation6 + $0x20] sm:$0xff]
        %v428 = vld [vmem:[#allocation6 + $0x28] sm:$0xff]
        %v429 = vld [vmem:[#allocation6 + $0x30] sm:$0xff]
        %v430 = vld [vmem:[#allocation6 + $0x38] sm:$0xff]
        %v431 = vld [vmem:[#allocation6 + $0x40] sm:$0xff]
        %v432 = vld [vmem:[#allocation6 + $0x48] sm:$0xff]
        %v433 = vld [vmem:[#allocation6 + $0x50] sm:$0xff]
        %v434 = vld [vmem:[#allocation6 + $0x58] sm:$0xff]
        %v435 = vld [vmem:[#allocation6 + $0x60] sm:$0xff]
        %v436 = vld [vmem:[#allocation6 + $0x68] sm:$0xff]
        %v437 = vld [vmem:[#allocation6 + $0x70] sm:$0xff]
        %v438 = vld [vmem:[#allocation6 + $0x78] sm:$0xff]
        %v439 = vld [vmem:[#allocation6 + $0x80] sm:$0xff]
        %v440 = vld [vmem:[#allocation6 + $0x88] sm:$0xff]
        %v441 = vld [vmem:[#allocation6 + $0x90] sm:$0xff]
        %v442 = vld [vmem:[#allocation6 + $0x98] sm:$0xff]
        %v443 = vld [vmem:[#allocation6 + $0xa0] sm:$0xff]
        %v444 = vld [vmem:[#allocation6 + $0xa8] sm:$0xff]
        %v445 = vld [vmem:[#allocation6 + $0xb0] sm:$0xff]
        %v446 = vld [vmem:[#allocation6 + $0xb8] sm:$0xff]
        %v447 = vld [vmem:[#allocation6 + $0xc0] sm:$0xff]
        %v448 = vld [vmem:[#allocation6 + $0xc8] sm:$0xff]
        %v449 = vld [vmem:[#allocation6 + $0xd0] sm:$0xff]
        %v450 = vld [vmem:[#allocation6 + $0xd8] sm:$0xff]
        %v451 = vld [vmem:[#allocation6 + $0xe0] sm:$0xff]
        %v452 = vld [vmem:[#allocation6 + $0xe8] sm:$0xff]
        %v453 = vld [vmem:[#allocation6 + $0xf0] sm:$0xff]
        %v454 = vld [vmem:[#allocation6 + $0xf8] sm:$0xff]
        %v455 = vld [vmem:[#allocation6 + $0x100] sm:$0xff]
        %v456 = vld [vmem:[#allocation6 + $0x108] sm:$0xff]
        %v457 = vld [vmem:[#allocation6 + $0x110] sm:$0xff]
        %v458 = vld [vmem:[#allocation6 + $0x118] sm:$0xff]
        %v459 = vld [vmem:[#allocation6 + $0x120] sm:$0xff]
        %v460 = vld [vmem:[#allocation6 + $0x128] sm:$0xff]
        %v461 = vld [vmem:[#allocation6 + $0x130] sm:$0xff]
        %v462 = vld [vmem:[#allocation6 + $0x138] sm:$0xff]
        %v463 = vld [vmem:[#allocation6 + $0x140] sm:$0xff]
        %v464 = vld [vmem:[#allocation6 + $0x148] sm:$0xff]
        %v465 = vld [vmem:[#allocation6 + $0x150] sm:$0xff]
        %v466 = vld [vmem:[#allocation6 + $0x158] sm:$0xff]
        %v467 = vld [vmem:[#allocation6 + $0x160] sm:$0xff]
        %v468 = vld [vmem:[#allocation6 + $0x168] sm:$0xff]
        %v469 = vld [vmem:[#allocation6 + $0x170] sm:$0xff]
        %v470 = vld [vmem:[#allocation6 + $0x178] sm:$0xff]
        %471 = vmatprep.subr.mxu0 0.0
        %472 = vmatpush1.msra.mxu0 %v438
        %473 = vmatprep.subr.mxu0 0.0
        %474 = vmatpush1.msra.mxu0 %v437
        %475 = vmatprep.subr.mxu0 0.0
        %476 = vmatpush1.msra.mxu0 %v436
        %477 = vmatprep.subr.mxu0 0.0
        %478 = vmatpush1.msra.mxu0 %v435
        %479 = vmatprep.subr.mxu0 0.0
        %480 = vmatpush1.msra.mxu0 %v434
        %481 = vmatprep.subr.mxu0 0.0
        %482 = vmatpush1.msra.mxu0 %v433
        %483 = vmatprep.subr.mxu0 0.0
        %484 = vmatpush1.msra.mxu0 %v432
        %485 = vmatprep.subr.mxu0 0.0
        %486 = vmatpush1.msra.mxu0 %v431
        %487 = vmatprep.subr.mxu0 0.0
        %488 = vmatpush1.msra.mxu0 %v430
        %489 = vmatprep.subr.mxu0 0.0
        %490 = vmatpush1.msra.mxu0 %v429
        %491 = vmatprep.subr.mxu0 0.0
        %492 = vmatpush1.msra.mxu0 %v428
        %493 = vmatprep.subr.mxu0 0.0
        %494 = vmatpush1.msra.mxu0 %v427
        %495 = vmatprep.subr.mxu0 0.0
        %496 = vmatpush1.msra.mxu0 %v426
        %497 = vmatprep.subr.mxu0 0.0
        %498 = vmatpush1.msra.mxu0 %v425
        %499 = vmatprep.subr.mxu0 0.0
        %500 = vmatpush1.msra.mxu0 %v424
        %501 = vmatprep.subr.mxu0 0.0
        %502 = vmatpush1.msra.mxu0 %v423
        %503 = vmatprep.subr.mxu0 0.0
        %504 = vmatpush2.msra.mxu0 %v454
        %505 = vmatprep.subr.mxu0 0.0
        %506 = vmatpush2.msra.mxu0 %v453
        %507 = vmatprep.subr.mxu0 0.0
        %508 = vmatpush2.msra.mxu0 %v452
        %509 = vmatprep.subr.mxu0 0.0
        %510 = vmatpush2.msra.mxu0 %v451
        %511 = vmatprep.subr.mxu0 0.0
        %512 = vmatpush2.msra.mxu0 %v450
        %513 = vmatprep.subr.mxu0 0.0
        %514 = vmatpush2.msra.mxu0 %v449
        %515 = vmatprep.subr.mxu0 0.0
        %516 = vmatpush2.msra.mxu0 %v448
        %517 = vmatprep.subr.mxu0 0.0
        %518 = vmatpush2.msra.mxu0 %v447
        %519 = vmatprep.subr.mxu0 0.0
        %520 = vmatpush2.msra.mxu0 %v446
        %521 = vmatprep.subr.mxu0 0.0
        %522 = vmatpush2.msra.mxu0 %v445
        %523 = vmatprep.subr.mxu0 0.0
        %524 = vmatpush2.msra.mxu0 %v444
        %525 = vmatprep.subr.mxu0 0.0
        %526 = vmatpush2.msra.mxu0 %v443
        %527 = vmatprep.subr.mxu0 0.0
        %528 = vmatpush2.msra.mxu0 %v442
        %529 = vmatprep.subr.mxu0 0.0
        %530 = vmatpush2.msra.mxu0 %v441
        %531 = vmatprep.subr.mxu0 0.0
        %532 = vmatpush2.msra.mxu0 %v440
        %533 = vmatprep.subr.mxu0 0.0
        %534 = vmatpush2.msra.mxu0 %v439
        %535 = vmatprep.mubr.f32.mxu0 %v296
        %536 = vmatmul.mubr.f32.gmra.mxu0 %v245
        %v537 = vpop.f32.mrf.mxu0
        %v538 = vadd.f32 0.0, %v537
        %v539 = vpop.f32.mrf.mxu0
        %540 = vmatprep.mubr.f32.mxu0 %v298
        %541 = vmatmul.mubr.f32.gmra.mxu0 %v246
        %v542 = vpop.f32.mrf.mxu0
        %v543 = vadd.f32 0.0, %v542
        %v544 = vpop.f32.mrf.mxu0
        %545 = vmatprep.mubr.f32.mxu0 %v301
        %546 = vmatmul.mubr.f32.gmra.mxu0 %v248
        %v547 = vpop.f32.mrf.mxu0
        %v548 = vadd.f32 0.0, %v547
        %v549 = vpop.f32.mrf.mxu0
        %550 = vmatprep.mubr.f32.mxu0 %v303
        %551 = vmatmul.mubr.f32.gmra.mxu0 %v249
        %v552 = vpop.f32.mrf.mxu0
        %v553 = vadd.f32 0.0, %v552
        %v554 = vpop.f32.mrf.mxu0
        %555 = vmatprep.mubr.f32.mxu0 %v306
        %556 = vmatmul.mubr.f32.gmra.mxu0 %v251
        %v557 = vpop.f32.mrf.mxu0
        %v558 = vadd.f32 0.0, %v557
        %v559 = vpop.f32.mrf.mxu0
        %560 = vmatprep.mubr.f32.mxu0 %v308
        %561 = vmatmul.mubr.f32.gmra.mxu0 %v252
        %v562 = vpop.f32.mrf.mxu0
        %v563 = vadd.f32 0.0, %v562
        %v564 = vpop.f32.mrf.mxu0
        %565 = vmatprep.mubr.f32.mxu0 %v311
        %566 = vmatmul.mubr.f32.gmra.mxu0 %v254
        %v567 = vpop.f32.mrf.mxu0
        %v568 = vadd.f32 0.0, %v567
        %v569 = vpop.f32.mrf.mxu0
        %570 = vmatprep.mubr.f32.mxu0 %v313
        %571 = vmatmul.mubr.f32.gmra.mxu0 %v255
        %v572 = vpop.f32.mrf.mxu0
        %v573 = vadd.f32 0.0, %v572
        %v574 = vpop.f32.mrf.mxu0
        %575 = vmatprep.mubr.f32.mxu0 %v316
        %576 = vmatmul.mubr.f32.gmra.mxu0 %v257
        %v577 = vpop.f32.mrf.mxu0
        %v578 = vadd.f32 0.0, %v577
        %v579 = vpop.f32.mrf.mxu0
        %580 = vmatprep.mubr.f32.mxu0 %v318
        %581 = vmatmul.mubr.f32.gmra.mxu0 %v258
        %v582 = vpop.f32.mrf.mxu0
        %v583 = vadd.f32 0.0, %v582
        %v584 = vpop.f32.mrf.mxu0
        %585 = vmatprep.mubr.f32.mxu0 %v321
        %586 = vmatmul.mubr.f32.gmra.mxu0 %v260
        %v587 = vpop.f32.mrf.mxu0
        %v588 = vadd.f32 0.0, %v587
        %v589 = vpop.f32.mrf.mxu0
        %590 = vmatprep.mubr.f32.mxu0 %v323
        %591 = vmatmul.mubr.f32.gmra.mxu0 %v261
        %v592 = vpop.f32.mrf.mxu0
        %v593 = vadd.f32 0.0, %v592
        %v594 = vpop.f32.mrf.mxu0
        %595 = vmatprep.mubr.f32.mxu0 %v326
        %596 = vmatmul.mubr.f32.gmra.mxu0 %v263
        %v597 = vpop.f32.mrf.mxu0
        %v598 = vadd.f32 0.0, %v597
        %v599 = vpop.f32.mrf.mxu0
        %600 = vmatprep.mubr.f32.mxu0 %v328
        %601 = vmatmul.mubr.f32.gmra.mxu0 %v264
        %v602 = vpop.f32.mrf.mxu0
        %v603 = vadd.f32 0.0, %v602
        %v604 = vpop.f32.mrf.mxu0
        %605 = vmatprep.mubr.f32.mxu0 %v331
        %606 = vmatmul.mubr.f32.gmra.mxu0 %v266
        %v607 = vpop.f32.mrf.mxu0
        %v608 = vadd.f32 0.0, %v607
        %v609 = vpop.f32.mrf.mxu0
        %610 = vmatprep.mubr.f32.mxu0 %v333
        %611 = vmatmul.mubr.f32.gmra.mxu0 %v267
        %v612 = vpop.f32.mrf.mxu0
        %v613 = vadd.f32 0.0, %v612
        %v614 = vpop.f32.mrf.mxu0
        %615 = vdwg.mxu0
        %616 = vmatprep.subr.mxu0 0.0
        %617 = vmatpush1.msra.mxu0 %v470
        %618 = vmatprep.subr.mxu0 0.0
        %619 = vmatpush1.msra.mxu0 %v469
        %620 = vmatprep.subr.mxu0 0.0
        %621 = vmatpush1.msra.mxu0 %v468
        %622 = vmatprep.subr.mxu0 0.0
        %623 = vmatpush1.msra.mxu0 %v467
        %624 = vmatprep.subr.mxu0 0.0
        %625 = vmatpush1.msra.mxu0 %v466
        %626 = vmatprep.subr.mxu0 0.0
        %627 = vmatpush1.msra.mxu0 %v465
        %628 = vmatprep.subr.mxu0 0.0
        %629 = vmatpush1.msra.mxu0 %v464
        %630 = vmatprep.subr.mxu0 0.0
        %631 = vmatpush1.msra.mxu0 %v463
        %632 = vmatprep.subr.mxu0 0.0
        %633 = vmatpush1.msra.mxu0 %v462
        %634 = vmatprep.subr.mxu0 0.0
        %635 = vmatpush1.msra.mxu0 %v461
        %636 = vmatprep.subr.mxu0 0.0
        %637 = vmatpush1.msra.mxu0 %v460
        %638 = vmatprep.subr.mxu0 0.0
        %639 = vmatpush1.msra.mxu0 %v459
        %640 = vmatprep.subr.mxu0 0.0
        %641 = vmatpush1.msra.mxu0 %v458
        %642 = vmatprep.subr.mxu0 0.0
        %643 = vmatpush1.msra.mxu0 %v457
        %644 = vmatprep.subr.mxu0 0.0
        %645 = vmatpush1.msra.mxu0 %v456
        %646 = vmatprep.subr.mxu0 0.0
        %647 = vmatpush1.msra.mxu0 %v455
        %648 = vmatprep.subr.mxu0 0.0
        %649 = vmatpush2.msra.mxu0 0.0
        %650 = vmatprep.subr.mxu0 0.0
        %651 = vmatpush2.msra.mxu0 0.0
        %652 = vmatprep.subr.mxu0 0.0
        %653 = vmatpush2.msra.mxu0 0.0
        %654 = vmatprep.subr.mxu0 0.0
        %655 = vmatpush2.msra.mxu0 0.0
        %656 = vmatprep.subr.mxu0 0.0
        %657 = vmatpush2.msra.mxu0 0.0
        %658 = vmatprep.subr.mxu0 0.0
        %659 = vmatpush2.msra.mxu0 0.0
        %660 = vmatprep.subr.mxu0 0.0
        %661 = vmatpush2.msra.mxu0 0.0
        %662 = vmatprep.subr.mxu0 0.0
        %663 = vmatpush2.msra.mxu0 0.0
        %664 = vmatprep.subr.mxu0 0.0
        %665 = vmatpush2.msra.mxu0 0.0
        %666 = vmatprep.subr.mxu0 0.0
        %667 = vmatpush2.msra.mxu0 0.0
        %668 = vmatprep.subr.mxu0 0.0
        %669 = vmatpush2.msra.mxu0 0.0
        %670 = vmatprep.subr.mxu0 0.0
        %671 = vmatpush2.msra.mxu0 0.0
        %672 = vmatprep.subr.mxu0 0.0
        %673 = vmatpush2.msra.mxu0 0.0
        %674 = vmatprep.subr.mxu0 0.0
        %675 = vmatpush2.msra.mxu0 0.0
        %676 = vmatprep.subr.mxu0 0.0
        %677 = vmatpush2.msra.mxu0 0.0
        %678 = vmatprep.subr.mxu0 0.0
        %679 = vmatpush2.msra.mxu0 0.0
        %680 = vmatprep.mubr.f32.mxu0 0.0
        %681 = vmatmul.mubr.f32.gmra.mxu0 %v353
        %v682 = vpop.f32.mrf.mxu0
        %v683 = vadd.f32 %v538, %v682
        %v684 = vpop.f32.mrf.mxu0
        %685 = vmatprep.mubr.f32.mxu0 0.0
        %686 = vmatmul.mubr.f32.gmra.mxu0 %v355
        %v687 = vpop.f32.mrf.mxu0
        %v688 = vadd.f32 %v543, %v687
        %v689 = vpop.f32.mrf.mxu0
        %690 = vmatprep.mubr.f32.mxu0 0.0
        %691 = vmatmul.mubr.f32.gmra.mxu0 %v358
        %v692 = vpop.f32.mrf.mxu0
        %v693 = vadd.f32 %v548, %v692
        %v694 = vpop.f32.mrf.mxu0
        %695 = vmatprep.mubr.f32.mxu0 0.0
        %696 = vmatmul.mubr.f32.gmra.mxu0 %v360
        %v697 = vpop.f32.mrf.mxu0
        %v698 = vadd.f32 %v553, %v697
        %v699 = vpop.f32.mrf.mxu0
        %700 = vmatprep.mubr.f32.mxu0 0.0
        %701 = vmatmul.mubr.f32.gmra.mxu0 %v363
        %v702 = vpop.f32.mrf.mxu0
        %v703 = vadd.f32 %v558, %v702
        %v704 = vpop.f32.mrf.mxu0
        %705 = vmatprep.mubr.f32.mxu0 0.0
        %706 = vmatmul.mubr.f32.gmra.mxu0 %v365
        %v707 = vpop.f32.mrf.mxu0
        %v708 = vadd.f32 %v563, %v707
        %v709 = vpop.f32.mrf.mxu0
        %710 = vmatprep.mubr.f32.mxu0 0.0
        %711 = vmatmul.mubr.f32.gmra.mxu0 %v368
        %v712 = vpop.f32.mrf.mxu0
        %v713 = vadd.f32 %v568, %v712
        %v714 = vpop.f32.mrf.mxu0
        %715 = vmatprep.mubr.f32.mxu0 0.0
        %716 = vmatmul.mubr.f32.gmra.mxu0 %v370
        %v717 = vpop.f32.mrf.mxu0
        %v718 = vadd.f32 %v573, %v717
        %v719 = vpop.f32.mrf.mxu0
        %720 = vmatprep.mubr.f32.mxu0 0.0
        %721 = vmatmul.mubr.f32.gmra.mxu0 %v373
        %v722 = vpop.f32.mrf.mxu0
        %v723 = vadd.f32 %v578, %v722
        %v724 = vpop.f32.mrf.mxu0
        %725 = vmatprep.mubr.f32.mxu0 0.0
        %726 = vmatmul.mubr.f32.gmra.mxu0 %v375
        %v727 = vpop.f32.mrf.mxu0
        %v728 = vadd.f32 %v583, %v727
        %v729 = vpop.f32.mrf.mxu0
        %730 = vmatprep.mubr.f32.mxu0 0.0
        %731 = vmatmul.mubr.f32.gmra.mxu0 %v378
        %v732 = vpop.f32.mrf.mxu0
        %v733 = vadd.f32 %v588, %v732
        %v734 = vpop.f32.mrf.mxu0
        %735 = vmatprep.mubr.f32.mxu0 0.0
        %736 = vmatmul.mubr.f32.gmra.mxu0 %v380
        %v737 = vpop.f32.mrf.mxu0
        %v738 = vadd.f32 %v593, %v737
        %v739 = vpop.f32.mrf.mxu0
        %740 = vmatprep.mubr.f32.mxu0 0.0
        %741 = vmatmul.mubr.f32.gmra.mxu0 %v383
        %v742 = vpop.f32.mrf.mxu0
        %v743 = vadd.f32 %v598, %v742
        %v744 = vpop.f32.mrf.mxu0
        %745 = vmatprep.mubr.f32.mxu0 0.0
        %746 = vmatmul.mubr.f32.gmra.mxu0 %v385
        %v747 = vpop.f32.mrf.mxu0
        %v748 = vadd.f32 %v603, %v747
        %v749 = vpop.f32.mrf.mxu0
        %750 = vmatprep.mubr.f32.mxu0 0.0
        %751 = vmatmul.mubr.f32.gmra.mxu0 %v388
        %v752 = vpop.f32.mrf.mxu0
        %v753 = vadd.f32 %v608, %v752
        %v754 = vpop.f32.mrf.mxu0
        %755 = vmatprep.mubr.f32.mxu0 0.0
        %756 = vmatmul.mubr.f32.gmra.mxu0 %v390
        %v757 = vpop.f32.mrf.mxu0
        %v758 = vadd.f32 %v613, %v757
        %v759 = vpop.f32.mrf.mxu0
        %760 = vdwg.mxu0
        %v761 = vadd.f32 %v407, %v683
        %v762 = vadd.f32 %v408, %v688
        %v763 = vadd.f32 %v409, %v693
        %v764 = vadd.f32 %v410, %v698
        %v765 = vadd.f32 %v411, %v703
        %v766 = vadd.f32 %v412, %v708
        %v767 = vadd.f32 %v413, %v713
        %v768 = vadd.f32 %v414, %v718
        %v769 = vadd.f32 %v415, %v723
        %v770 = vadd.f32 %v416, %v728
        %v771 = vadd.f32 %v417, %v733
        %v772 = vadd.f32 %v418, %v738
        %v773 = vadd.f32 %v419, %v743
        %v774 = vadd.f32 %v420, %v748
        %v775 = vadd.f32 %v421, %v753
        %v776 = vadd.f32 %v422, %v758
        %777 = vst [vmem:[#allocation2] sm:$0xff] %v761
        %778 = vst [vmem:[#allocation2 + $0x8] sm:$0xff] %v762
        %779 = vst [vmem:[#allocation2 + $0x10] sm:$0xff] %v763
        %780 = vst [vmem:[#allocation2 + $0x18] sm:$0xff] %v764
        %781 = vst [vmem:[#allocation2 + $0x20] sm:$0xff] %v765
        %782 = vst [vmem:[#allocation2 + $0x28] sm:$0xff] %v766
        %783 = vst [vmem:[#allocation2 + $0x30] sm:$0xff] %v767
        %784 = vst [vmem:[#allocation2 + $0x38] sm:$0xff] %v768
        %785 = vst [vmem:[#allocation2 + $0x40] sm:$0xff] %v769
        %786 = vst [vmem:[#allocation2 + $0x48] sm:$0xff] %v770
        %787 = vst [vmem:[#allocation2 + $0x50] sm:$0xff] %v771
        %788 = vst [vmem:[#allocation2 + $0x58] sm:$0xff] %v772
        %789 = vst [vmem:[#allocation2 + $0x60] sm:$0xff] %v773
        %790 = vst [vmem:[#allocation2 + $0x68] sm:$0xff] %v774
        %791 = vst [vmem:[#allocation2 + $0x70] sm:$0xff] %v775
        %792 = vst [vmem:[#allocation2 + $0x78] sm:$0xff] %v776
        %s793 = scalar_lea.vmem %s195, 24 [#allocation3]
        %v794 = vld [vmem:[%s793] sm:$0xff]
        %v795 = vld [vmem:[%s793 + $0x8] sm:$0xff]
        %v796 = vld [vmem:[%s793 + $0x10] sm:$0xff]
        %v797 = vld [vmem:[%s793 + $0x18] sm:$0xff]
        %v798 = vld [vmem:[%s793 + $0x20] sm:$0xff]
        %v799 = vld [vmem:[%s793 + $0x28] sm:$0xff]
        %v800 = vld [vmem:[%s793 + $0x30] sm:$0xff]
        %v801 = vld [vmem:[%s793 + $0x38] sm:$0xff]
        %v802 = vld [vmem:[%s793 + $0x40] sm:$0xff]
        %v803 = vld [vmem:[%s793 + $0x48] sm:$0xff]
        %v804 = vld [vmem:[%s793 + $0x50] sm:$0xff]
        %v805 = vld [vmem:[%s793 + $0x58] sm:$0xff]
        %v806 = vld [vmem:[%s793 + $0x60] sm:$0xff]
        %v807 = vld [vmem:[%s793 + $0x68] sm:$0xff]
        %v808 = vld [vmem:[%s793 + $0x70] sm:$0xff]
        %v809 = vld [vmem:[%s793 + $0x78] sm:$0xff]
        %v810 = vld [vmem:[%s793 + $0x80] sm:$0xff]
        %v811 = vld [vmem:[%s793 + $0x88] sm:$0xff]
        %v812 = vld [vmem:[%s793 + $0x90] sm:$0xff]
        %v813 = vld [vmem:[%s793 + $0x98] sm:$0xff]
        %v814 = vld [vmem:[%s793 + $0xa0] sm:$0xff]
        %v815 = vld [vmem:[%s793 + $0xa8] sm:$0xff]
        %v816 = vld [vmem:[%s793 + $0xb0] sm:$0xff]
        %v817 = vld [vmem:[%s793 + $0xb8] sm:$0xff]
        %v842 = vrot.slane %v794, 1
        %v843 = vrot.slane %v795, 1
        %v844 = vsel %vm293, %v842, %v843
        %v845 = vrot.slane %v796, 1
        %v846 = vsel %vm293, %v843, %v845
        %v847 = vrot.slane %v797, 1
        %v848 = vrot.slane %v798, 1
        %v849 = vsel %vm293, %v847, %v848
        %v850 = vrot.slane %v799, 1
        %v851 = vsel %vm293, %v848, %v850
        %v852 = vrot.slane %v800, 1
        %v853 = vrot.slane %v801, 1
        %v854 = vsel %vm293, %v852, %v853
        %v855 = vrot.slane %v802, 1
        %v856 = vsel %vm293, %v853, %v855
        %v857 = vrot.slane %v803, 1
        %v858 = vrot.slane %v804, 1
        %v859 = vsel %vm293, %v857, %v858
        %v860 = vrot.slane %v805, 1
        %v861 = vsel %vm293, %v858, %v860
        %v862 = vrot.slane %v806, 1
        %v863 = vrot.slane %v807, 1
        %v864 = vsel %vm293, %v862, %v863
        %v865 = vrot.slane %v808, 1
        %v866 = vsel %vm293, %v863, %v865
        %v867 = vrot.slane %v809, 1
        %v868 = vrot.slane %v810, 1
        %v869 = vsel %vm293, %v867, %v868
        %v870 = vrot.slane %v811, 1
        %v871 = vsel %vm293, %v868, %v870
        %v872 = vrot.slane %v812, 1
        %v873 = vrot.slane %v813, 1
        %v874 = vsel %vm293, %v872, %v873
        %v875 = vrot.slane %v814, 1
        %v876 = vsel %vm293, %v873, %v875
        %v877 = vrot.slane %v815, 1
        %v878 = vrot.slane %v816, 1
        %v879 = vsel %vm293, %v877, %v878
        %v880 = vrot.slane %v817, 1
        %v881 = vsel %vm293, %v878, %v880
        %v898 = vrot.slane %v794, 2
        %v899 = vrot.slane %v795, 2
        %v900 = vsel %vm350, %v898, %v899
        %v901 = vrot.slane %v796, 2
        %v902 = vsel %vm350, %v899, %v901
        %v903 = vrot.slane %v797, 2
        %v904 = vrot.slane %v798, 2
        %v905 = vsel %vm350, %v903, %v904
        %v906 = vrot.slane %v799, 2
        %v907 = vsel %vm350, %v904, %v906
        %v908 = vrot.slane %v800, 2
        %v909 = vrot.slane %v801, 2
        %v910 = vsel %vm350, %v908, %v909
        %v911 = vrot.slane %v802, 2
        %v912 = vsel %vm350, %v909, %v911
        %v913 = vrot.slane %v803, 2
        %v914 = vrot.slane %v804, 2
        %v915 = vsel %vm350, %v913, %v914
        %v916 = vrot.slane %v805, 2
        %v917 = vsel %vm350, %v914, %v916
        %v918 = vrot.slane %v806, 2
        %v919 = vrot.slane %v807, 2
        %v920 = vsel %vm350, %v918, %v919
        %v921 = vrot.slane %v808, 2
        %v922 = vsel %vm350, %v919, %v921
        %v923 = vrot.slane %v809, 2
        %v924 = vrot.slane %v810, 2
        %v925 = vsel %vm350, %v923, %v924
        %v926 = vrot.slane %v811, 2
        %v927 = vsel %vm350, %v924, %v926
        %v928 = vrot.slane %v812, 2
        %v929 = vrot.slane %v813, 2
        %v930 = vsel %vm350, %v928, %v929
        %v931 = vrot.slane %v814, 2
        %v932 = vsel %vm350, %v929, %v931
        %v933 = vrot.slane %v815, 2
        %v934 = vrot.slane %v816, 2
        %v935 = vsel %vm350, %v933, %v934
        %v936 = vrot.slane %v817, 2
        %v937 = vsel %vm350, %v934, %v936
        %v954 = vld [vmem:[#allocation2] sm:$0xff]
        %v955 = vld [vmem:[#allocation2 + $0x8] sm:$0xff]
        %v956 = vld [vmem:[#allocation2 + $0x10] sm:$0xff]
        %v957 = vld [vmem:[#allocation2 + $0x18] sm:$0xff]
        %v958 = vld [vmem:[#allocation2 + $0x20] sm:$0xff]
        %v959 = vld [vmem:[#allocation2 + $0x28] sm:$0xff]
        %v960 = vld [vmem:[#allocation2 + $0x30] sm:$0xff]
        %v961 = vld [vmem:[#allocation2 + $0x38] sm:$0xff]
        %v962 = vld [vmem:[#allocation2 + $0x40] sm:$0xff]
        %v963 = vld [vmem:[#allocation2 + $0x48] sm:$0xff]
        %v964 = vld [vmem:[#allocation2 + $0x50] sm:$0xff]
        %v965 = vld [vmem:[#allocation2 + $0x58] sm:$0xff]
        %v966 = vld [vmem:[#allocation2 + $0x60] sm:$0xff]
        %v967 = vld [vmem:[#allocation2 + $0x68] sm:$0xff]
        %v968 = vld [vmem:[#allocation2 + $0x70] sm:$0xff]
        %v969 = vld [vmem:[#allocation2 + $0x78] sm:$0xff]
        %s970 = scalar_lea.vmem [#allocation6], 384
        %v971 = vld [vmem:[%s970] sm:$0xff]
        %v972 = vld [vmem:[%s970 + $0x8] sm:$0xff]
        %v973 = vld [vmem:[%s970 + $0x10] sm:$0xff]
        %v974 = vld [vmem:[%s970 + $0x18] sm:$0xff]
        %v975 = vld [vmem:[%s970 + $0x20] sm:$0xff]
        %v976 = vld [vmem:[%s970 + $0x28] sm:$0xff]
        %v977 = vld [vmem:[%s970 + $0x30] sm:$0xff]
        %v978 = vld [vmem:[%s970 + $0x38] sm:$0xff]
        %v979 = vld [vmem:[%s970 + $0x40] sm:$0xff]
        %v980 = vld [vmem:[%s970 + $0x48] sm:$0xff]
        %v981 = vld [vmem:[%s970 + $0x50] sm:$0xff]
        %v982 = vld [vmem:[%s970 + $0x58] sm:$0xff]
        %v983 = vld [vmem:[%s970 + $0x60] sm:$0xff]
        %v984 = vld [vmem:[%s970 + $0x68] sm:$0xff]
        %v985 = vld [vmem:[%s970 + $0x70] sm:$0xff]
        %v986 = vld [vmem:[%s970 + $0x78] sm:$0xff]
        %v987 = vld [vmem:[%s970 + $0x80] sm:$0xff]
        %v988 = vld [vmem:[%s970 + $0x88] sm:$0xff]
        %v989 = vld [vmem:[%s970 + $0x90] sm:$0xff]
        %v990 = vld [vmem:[%s970 + $0x98] sm:$0xff]
        %v991 = vld [vmem:[%s970 + $0xa0] sm:$0xff]
        %v992 = vld [vmem:[%s970 + $0xa8] sm:$0xff]
        %v993 = vld [vmem:[%s970 + $0xb0] sm:$0xff]
        %v994 = vld [vmem:[%s970 + $0xb8] sm:$0xff]
        %v995 = vld [vmem:[%s970 + $0xc0] sm:$0xff]
        %v996 = vld [vmem:[%s970 + $0xc8] sm:$0xff]
        %v997 = vld [vmem:[%s970 + $0xd0] sm:$0xff]
        %v998 = vld [vmem:[%s970 + $0xd8] sm:$0xff]
        %v999 = vld [vmem:[%s970 + $0xe0] sm:$0xff]
        %v1000 = vld [vmem:[%s970 + $0xe8] sm:$0xff]
        %v1001 = vld [vmem:[%s970 + $0xf0] sm:$0xff]
        %v1002 = vld [vmem:[%s970 + $0xf8] sm:$0xff]
        %v1003 = vld [vmem:[%s970 + $0x100] sm:$0xff]
        %v1004 = vld [vmem:[%s970 + $0x108] sm:$0xff]
        %v1005 = vld [vmem:[%s970 + $0x110] sm:$0xff]
        %v1006 = vld [vmem:[%s970 + $0x118] sm:$0xff]
        %v1007 = vld [vmem:[%s970 + $0x120] sm:$0xff]
        %v1008 = vld [vmem:[%s970 + $0x128] sm:$0xff]
        %v1009 = vld [vmem:[%s970 + $0x130] sm:$0xff]
        %v1010 = vld [vmem:[%s970 + $0x138] sm:$0xff]
        %v1011 = vld [vmem:[%s970 + $0x140] sm:$0xff]
        %v1012 = vld [vmem:[%s970 + $0x148] sm:$0xff]
        %v1013 = vld [vmem:[%s970 + $0x150] sm:$0xff]
        %v1014 = vld [vmem:[%s970 + $0x158] sm:$0xff]
        %v1015 = vld [vmem:[%s970 + $0x160] sm:$0xff]
        %v1016 = vld [vmem:[%s970 + $0x168] sm:$0xff]
        %v1017 = vld [vmem:[%s970 + $0x170] sm:$0xff]
        %v1018 = vld [vmem:[%s970 + $0x178] sm:$0xff]
        %1019 = vmatprep.subr.mxu0 0.0
        %1020 = vmatpush1.msra.mxu0 %v986
        %1021 = vmatprep.subr.mxu0 0.0
        %1022 = vmatpush1.msra.mxu0 %v985
        %1023 = vmatprep.subr.mxu0 0.0
        %1024 = vmatpush1.msra.mxu0 %v984
        %1025 = vmatprep.subr.mxu0 0.0
        %1026 = vmatpush1.msra.mxu0 %v983
        %1027 = vmatprep.subr.mxu0 0.0
        %1028 = vmatpush1.msra.mxu0 %v982
        %1029 = vmatprep.subr.mxu0 0.0
        %1030 = vmatpush1.msra.mxu0 %v981
        %1031 = vmatprep.subr.mxu0 0.0
        %1032 = vmatpush1.msra.mxu0 %v980
        %1033 = vmatprep.subr.mxu0 0.0
        %1034 = vmatpush1.msra.mxu0 %v979
        %1035 = vmatprep.subr.mxu0 0.0
        %1036 = vmatpush1.msra.mxu0 %v978
        %1037 = vmatprep.subr.mxu0 0.0
        %1038 = vmatpush1.msra.mxu0 %v977
        %1039 = vmatprep.subr.mxu0 0.0
        %1040 = vmatpush1.msra.mxu0 %v976
        %1041 = vmatprep.subr.mxu0 0.0
        %1042 = vmatpush1.msra.mxu0 %v975
        %1043 = vmatprep.subr.mxu0 0.0
        %1044 = vmatpush1.msra.mxu0 %v974
        %1045 = vmatprep.subr.mxu0 0.0
        %1046 = vmatpush1.msra.mxu0 %v973
        %1047 = vmatprep.subr.mxu0 0.0
        %1048 = vmatpush1.msra.mxu0 %v972
        %1049 = vmatprep.subr.mxu0 0.0
        %1050 = vmatpush1.msra.mxu0 %v971
        %1051 = vmatprep.subr.mxu0 0.0
        %1052 = vmatpush2.msra.mxu0 %v1002
        %1053 = vmatprep.subr.mxu0 0.0
        %1054 = vmatpush2.msra.mxu0 %v1001
        %1055 = vmatprep.subr.mxu0 0.0
        %1056 = vmatpush2.msra.mxu0 %v1000
        %1057 = vmatprep.subr.mxu0 0.0
        %1058 = vmatpush2.msra.mxu0 %v999
        %1059 = vmatprep.subr.mxu0 0.0
        %1060 = vmatpush2.msra.mxu0 %v998
        %1061 = vmatprep.subr.mxu0 0.0
        %1062 = vmatpush2.msra.mxu0 %v997
        %1063 = vmatprep.subr.mxu0 0.0
        %1064 = vmatpush2.msra.mxu0 %v996
        %1065 = vmatprep.subr.mxu0 0.0
        %1066 = vmatpush2.msra.mxu0 %v995
        %1067 = vmatprep.subr.mxu0 0.0
        %1068 = vmatpush2.msra.mxu0 %v994
        %1069 = vmatprep.subr.mxu0 0.0
        %1070 = vmatpush2.msra.mxu0 %v993
        %1071 = vmatprep.subr.mxu0 0.0
        %1072 = vmatpush2.msra.mxu0 %v992
        %1073 = vmatprep.subr.mxu0 0.0
        %1074 = vmatpush2.msra.mxu0 %v991
        %1075 = vmatprep.subr.mxu0 0.0
        %1076 = vmatpush2.msra.mxu0 %v990
        %1077 = vmatprep.subr.mxu0 0.0
        %1078 = vmatpush2.msra.mxu0 %v989
        %1079 = vmatprep.subr.mxu0 0.0
        %1080 = vmatpush2.msra.mxu0 %v988
        %1081 = vmatprep.subr.mxu0 0.0
        %1082 = vmatpush2.msra.mxu0 %v987
        %1083 = vmatprep.mubr.f32.mxu0 %v844
        %1084 = vmatmul.mubr.f32.gmra.mxu0 %v794
        %v1085 = vpop.f32.mrf.mxu0
        %v1086 = vadd.f32 0.0, %v1085
        %v1087 = vpop.f32.mrf.mxu0
        %1088 = vmatprep.mubr.f32.mxu0 %v846
        %1089 = vmatmul.mubr.f32.gmra.mxu0 %v795
        %v1090 = vpop.f32.mrf.mxu0
        %v1091 = vadd.f32 0.0, %v1090
        %v1092 = vpop.f32.mrf.mxu0
        %1093 = vmatprep.mubr.f32.mxu0 %v849
        %1094 = vmatmul.mubr.f32.gmra.mxu0 %v797
        %v1095 = vpop.f32.mrf.mxu0
        %v1096 = vadd.f32 0.0, %v1095
        %v1097 = vpop.f32.mrf.mxu0
        %1098 = vmatprep.mubr.f32.mxu0 %v851
        %1099 = vmatmul.mubr.f32.gmra.mxu0 %v798
        %v1100 = vpop.f32.mrf.mxu0
        %v1101 = vadd.f32 0.0, %v1100
        %v1102 = vpop.f32.mrf.mxu0
        %1103 = vmatprep.mubr.f32.mxu0 %v854
        %1104 = vmatmul.mubr.f32.gmra.mxu0 %v800
        %v1105 = vpop.f32.mrf.mxu0
        %v1106 = vadd.f32 0.0, %v1105
        %v1107 = vpop.f32.mrf.mxu0
        %1108 = vmatprep.mubr.f32.mxu0 %v856
        %1109 = vmatmul.mubr.f32.gmra.mxu0 %v801
        %v1110 = vpop.f32.mrf.mxu0
        %v1111 = vadd.f32 0.0, %v1110
        %v1112 = vpop.f32.mrf.mxu0
        %1113 = vmatprep.mubr.f32.mxu0 %v859
        %1114 = vmatmul.mubr.f32.gmra.mxu0 %v803
        %v1115 = vpop.f32.mrf.mxu0
        %v1116 = vadd.f32 0.0, %v1115
        %v1117 = vpop.f32.mrf.mxu0
        %1118 = vmatprep.mubr.f32.mxu0 %v861
        %1119 = vmatmul.mubr.f32.gmra.mxu0 %v804
        %v1120 = vpop.f32.mrf.mxu0
        %v1121 = vadd.f32 0.0, %v1120
        %v1122 = vpop.f32.mrf.mxu0
        %1123 = vmatprep.mubr.f32.mxu0 %v864
        %1124 = vmatmul.mubr.f32.gmra.mxu0 %v806
        %v1125 = vpop.f32.mrf.mxu0
        %v1126 = vadd.f32 0.0, %v1125
        %v1127 = vpop.f32.mrf.mxu0
        %1128 = vmatprep.mubr.f32.mxu0 %v866
        %1129 = vmatmul.mubr.f32.gmra.mxu0 %v807
        %v1130 = vpop.f32.mrf.mxu0
        %v1131 = vadd.f32 0.0, %v1130
        %v1132 = vpop.f32.mrf.mxu0
        %1133 = vmatprep.mubr.f32.mxu0 %v869
        %1134 = vmatmul.mubr.f32.gmra.mxu0 %v809
        %v1135 = vpop.f32.mrf.mxu0
        %v1136 = vadd.f32 0.0, %v1135
        %v1137 = vpop.f32.mrf.mxu0
        %1138 = vmatprep.mubr.f32.mxu0 %v871
        %1139 = vmatmul.mubr.f32.gmra.mxu0 %v810
        %v1140 = vpop.f32.mrf.mxu0
        %v1141 = vadd.f32 0.0, %v1140
        %v1142 = vpop.f32.mrf.mxu0
        %1143 = vmatprep.mubr.f32.mxu0 %v874
        %1144 = vmatmul.mubr.f32.gmra.mxu0 %v812
        %v1145 = vpop.f32.mrf.mxu0
        %v1146 = vadd.f32 0.0, %v1145
        %v1147 = vpop.f32.mrf.mxu0
        %1148 = vmatprep.mubr.f32.mxu0 %v876
        %1149 = vmatmul.mubr.f32.gmra.mxu0 %v813
        %v1150 = vpop.f32.mrf.mxu0
        %v1151 = vadd.f32 0.0, %v1150
        %v1152 = vpop.f32.mrf.mxu0
        %1153 = vmatprep.mubr.f32.mxu0 %v879
        %1154 = vmatmul.mubr.f32.gmra.mxu0 %v815
        %v1155 = vpop.f32.mrf.mxu0
        %v1156 = vadd.f32 0.0, %v1155
        %v1157 = vpop.f32.mrf.mxu0
        %1158 = vmatprep.mubr.f32.mxu0 %v881
        %1159 = vmatmul.mubr.f32.gmra.mxu0 %v816
        %v1160 = vpop.f32.mrf.mxu0
        %v1161 = vadd.f32 0.0, %v1160
        %v1162 = vpop.f32.mrf.mxu0
        %1163 = vdwg.mxu0
        %1164 = vmatprep.subr.mxu0 0.0
        %1165 = vmatpush1.msra.mxu0 %v1018
        %1166 = vmatprep.subr.mxu0 0.0
        %1167 = vmatpush1.msra.mxu0 %v1017
        %1168 = vmatprep.subr.mxu0 0.0
        %1169 = vmatpush1.msra.mxu0 %v1016
        %1170 = vmatprep.subr.mxu0 0.0
        %1171 = vmatpush1.msra.mxu0 %v1015
        %1172 = vmatprep.subr.mxu0 0.0
        %1173 = vmatpush1.msra.mxu0 %v1014
        %1174 = vmatprep.subr.mxu0 0.0
        %1175 = vmatpush1.msra.mxu0 %v1013
        %1176 = vmatprep.subr.mxu0 0.0
        %1177 = vmatpush1.msra.mxu0 %v1012
        %1178 = vmatprep.subr.mxu0 0.0
        %1179 = vmatpush1.msra.mxu0 %v1011
        %1180 = vmatprep.subr.mxu0 0.0
        %1181 = vmatpush1.msra.mxu0 %v1010
        %1182 = vmatprep.subr.mxu0 0.0
        %1183 = vmatpush1.msra.mxu0 %v1009
        %1184 = vmatprep.subr.mxu0 0.0
        %1185 = vmatpush1.msra.mxu0 %v1008
        %1186 = vmatprep.subr.mxu0 0.0
        %1187 = vmatpush1.msra.mxu0 %v1007
        %1188 = vmatprep.subr.mxu0 0.0
        %1189 = vmatpush1.msra.mxu0 %v1006
        %1190 = vmatprep.subr.mxu0 0.0
        %1191 = vmatpush1.msra.mxu0 %v1005
        %1192 = vmatprep.subr.mxu0 0.0
        %1193 = vmatpush1.msra.mxu0 %v1004
        %1194 = vmatprep.subr.mxu0 0.0
        %1195 = vmatpush1.msra.mxu0 %v1003
        %1196 = vmatprep.subr.mxu0 0.0
        %1197 = vmatpush2.msra.mxu0 0.0
        %1198 = vmatprep.subr.mxu0 0.0
        %1199 = vmatpush2.msra.mxu0 0.0
        %1200 = vmatprep.subr.mxu0 0.0
        %1201 = vmatpush2.msra.mxu0 0.0
        %1202 = vmatprep.subr.mxu0 0.0
        %1203 = vmatpush2.msra.mxu0 0.0
        %1204 = vmatprep.subr.mxu0 0.0
        %1205 = vmatpush2.msra.mxu0 0.0
        %1206 = vmatprep.subr.mxu0 0.0
        %1207 = vmatpush2.msra.mxu0 0.0
        %1208 = vmatprep.subr.mxu0 0.0
        %1209 = vmatpush2.msra.mxu0 0.0
        %1210 = vmatprep.subr.mxu0 0.0
        %1211 = vmatpush2.msra.mxu0 0.0
        %1212 = vmatprep.subr.mxu0 0.0
        %1213 = vmatpush2.msra.mxu0 0.0
        %1214 = vmatprep.subr.mxu0 0.0
        %1215 = vmatpush2.msra.mxu0 0.0
        %1216 = vmatprep.subr.mxu0 0.0
        %1217 = vmatpush2.msra.mxu0 0.0
        %1218 = vmatprep.subr.mxu0 0.0
        %1219 = vmatpush2.msra.mxu0 0.0
        %1220 = vmatprep.subr.mxu0 0.0
        %1221 = vmatpush2.msra.mxu0 0.0
        %1222 = vmatprep.subr.mxu0 0.0
        %1223 = vmatpush2.msra.mxu0 0.0
        %1224 = vmatprep.subr.mxu0 0.0
        %1225 = vmatpush2.msra.mxu0 0.0
        %1226 = vmatprep.subr.mxu0 0.0
        %1227 = vmatpush2.msra.mxu0 0.0
        %1228 = vmatprep.mubr.f32.mxu0 0.0
        %1229 = vmatmul.mubr.f32.gmra.mxu0 %v900
        %v1230 = vpop.f32.mrf.mxu0
        %v1231 = vadd.f32 %v1086, %v1230
        %v1232 = vpop.f32.mrf.mxu0
        %1233 = vmatprep.mubr.f32.mxu0 0.0
        %1234 = vmatmul.mubr.f32.gmra.mxu0 %v902
        %v1235 = vpop.f32.mrf.mxu0
        %v1236 = vadd.f32 %v1091, %v1235
        %v1237 = vpop.f32.mrf.mxu0
        %1238 = vmatprep.mubr.f32.mxu0 0.0
        %1239 = vmatmul.mubr.f32.gmra.mxu0 %v905
        %v1240 = vpop.f32.mrf.mxu0
        %v1241 = vadd.f32 %v1096, %v1240
        %v1242 = vpop.f32.mrf.mxu0
        %1243 = vmatprep.mubr.f32.mxu0 0.0
        %1244 = vmatmul.mubr.f32.gmra.mxu0 %v907
        %v1245 = vpop.f32.mrf.mxu0
        %v1246 = vadd.f32 %v1101, %v1245
        %v1247 = vpop.f32.mrf.mxu0
        %1248 = vmatprep.mubr.f32.mxu0 0.0
        %1249 = vmatmul.mubr.f32.gmra.mxu0 %v910
        %v1250 = vpop.f32.mrf.mxu0
        %v1251 = vadd.f32 %v1106, %v1250
        %v1252 = vpop.f32.mrf.mxu0
        %1253 = vmatprep.mubr.f32.mxu0 0.0
        %1254 = vmatmul.mubr.f32.gmra.mxu0 %v912
        %v1255 = vpop.f32.mrf.mxu0
        %v1256 = vadd.f32 %v1111, %v1255
        %v1257 = vpop.f32.mrf.mxu0
        %1258 = vmatprep.mubr.f32.mxu0 0.0
        %1259 = vmatmul.mubr.f32.gmra.mxu0 %v915
        %v1260 = vpop.f32.mrf.mxu0
        %v1261 = vadd.f32 %v1116, %v1260
        %v1262 = vpop.f32.mrf.mxu0
        %1263 = vmatprep.mubr.f32.mxu0 0.0
        %1264 = vmatmul.mubr.f32.gmra.mxu0 %v917
        %v1265 = vpop.f32.mrf.mxu0
        %v1266 = vadd.f32 %v1121, %v1265
        %v1267 = vpop.f32.mrf.mxu0
        %1268 = vmatprep.mubr.f32.mxu0 0.0
        %1269 = vmatmul.mubr.f32.gmra.mxu0 %v920
        %v1270 = vpop.f32.mrf.mxu0
        %v1271 = vadd.f32 %v1126, %v1270
        %v1272 = vpop.f32.mrf.mxu0
        %1273 = vmatprep.mubr.f32.mxu0 0.0
        %1274 = vmatmul.mubr.f32.gmra.mxu0 %v922
        %v1275 = vpop.f32.mrf.mxu0
        %v1276 = vadd.f32 %v1131, %v1275
        %v1277 = vpop.f32.mrf.mxu0
        %1278 = vmatprep.mubr.f32.mxu0 0.0
        %1279 = vmatmul.mubr.f32.gmra.mxu0 %v925
        %v1280 = vpop.f32.mrf.mxu0
        %v1281 = vadd.f32 %v1136, %v1280
        %v1282 = vpop.f32.mrf.mxu0
        %1283 = vmatprep.mubr.f32.mxu0 0.0
        %1284 = vmatmul.mubr.f32.gmra.mxu0 %v927
        %v1285 = vpop.f32.mrf.mxu0
        %v1286 = vadd.f32 %v1141, %v1285
        %v1287 = vpop.f32.mrf.mxu0
        %1288 = vmatprep.mubr.f32.mxu0 0.0
        %1289 = vmatmul.mubr.f32.gmra.mxu0 %v930
        %v1290 = vpop.f32.mrf.mxu0
        %v1291 = vadd.f32 %v1146, %v1290
        %v1292 = vpop.f32.mrf.mxu0
        %1293 = vmatprep.mubr.f32.mxu0 0.0
        %1294 = vmatmul.mubr.f32.gmra.mxu0 %v932
        %v1295 = vpop.f32.mrf.mxu0
        %v1296 = vadd.f32 %v1151, %v1295
        %v1297 = vpop.f32.mrf.mxu0
        %1298 = vmatprep.mubr.f32.mxu0 0.0
        %1299 = vmatmul.mubr.f32.gmra.mxu0 %v935
        %v1300 = vpop.f32.mrf.mxu0
        %v1301 = vadd.f32 %v1156, %v1300
        %v1302 = vpop.f32.mrf.mxu0
        %1303 = vmatprep.mubr.f32.mxu0 0.0
        %1304 = vmatmul.mubr.f32.gmra.mxu0 %v937
        %v1305 = vpop.f32.mrf.mxu0
        %v1306 = vadd.f32 %v1161, %v1305
        %v1307 = vpop.f32.mrf.mxu0
        %1308 = vdwg.mxu0
        %v1309 = vadd.f32 %v954, %v1231
        %v1310 = vadd.f32 %v955, %v1236
        %v1311 = vadd.f32 %v956, %v1241
        %v1312 = vadd.f32 %v957, %v1246
        %v1313 = vadd.f32 %v958, %v1251
        %v1314 = vadd.f32 %v959, %v1256
        %v1315 = vadd.f32 %v960, %v1261
        %v1316 = vadd.f32 %v961, %v1266
        %v1317 = vadd.f32 %v962, %v1271
        %v1318 = vadd.f32 %v963, %v1276
        %v1319 = vadd.f32 %v964, %v1281
        %v1320 = vadd.f32 %v965, %v1286
        %v1321 = vadd.f32 %v966, %v1291
        %v1322 = vadd.f32 %v967, %v1296
        %v1323 = vadd.f32 %v968, %v1301
        %v1324 = vadd.f32 %v969, %v1306
        %1325 = vst [vmem:[#allocation2] sm:$0xff] %v1309
        %1326 = vst [vmem:[#allocation2 + $0x8] sm:$0xff] %v1310
        %1327 = vst [vmem:[#allocation2 + $0x10] sm:$0xff] %v1311
        %1328 = vst [vmem:[#allocation2 + $0x18] sm:$0xff] %v1312
        %1329 = vst [vmem:[#allocation2 + $0x20] sm:$0xff] %v1313
        %1330 = vst [vmem:[#allocation2 + $0x28] sm:$0xff] %v1314
        %1331 = vst [vmem:[#allocation2 + $0x30] sm:$0xff] %v1315
        %1332 = vst [vmem:[#allocation2 + $0x38] sm:$0xff] %v1316
        %1333 = vst [vmem:[#allocation2 + $0x40] sm:$0xff] %v1317
        %1334 = vst [vmem:[#allocation2 + $0x48] sm:$0xff] %v1318
        %1335 = vst [vmem:[#allocation2 + $0x50] sm:$0xff] %v1319
        %1336 = vst [vmem:[#allocation2 + $0x58] sm:$0xff] %v1320
        %1337 = vst [vmem:[#allocation2 + $0x60] sm:$0xff] %v1321
        %1338 = vst [vmem:[#allocation2 + $0x68] sm:$0xff] %v1322
        %1339 = vst [vmem:[#allocation2 + $0x70] sm:$0xff] %v1323
        %1340 = vst [vmem:[#allocation2 + $0x78] sm:$0xff] %v1324
        %s1341 = scalar_lea.vmem %s195, 48 [#allocation3]
        %v1342 = vld [vmem:[%s1341] sm:$0xff]
        %v1343 = vld [vmem:[%s1341 + $0x8] sm:$0xff]
        %v1344 = vld [vmem:[%s1341 + $0x10] sm:$0xff]
        %v1345 = vld [vmem:[%s1341 + $0x18] sm:$0xff]
        %v1346 = vld [vmem:[%s1341 + $0x20] sm:$0xff]
        %v1347 = vld [vmem:[%s1341 + $0x28] sm:$0xff]
        %v1348 = vld [vmem:[%s1341 + $0x30] sm:$0xff]
        %v1349 = vld [vmem:[%s1341 + $0x38] sm:$0xff]
        %v1350 = vld [vmem:[%s1341 + $0x40] sm:$0xff]
        %v1351 = vld [vmem:[%s1341 + $0x48] sm:$0xff]
        %v1352 = vld [vmem:[%s1341 + $0x50] sm:$0xff]
        %v1353 = vld [vmem:[%s1341 + $0x58] sm:$0xff]
        %v1354 = vld [vmem:[%s1341 + $0x60] sm:$0xff]
        %v1355 = vld [vmem:[%s1341 + $0x68] sm:$0xff]
        %v1356 = vld [vmem:[%s1341 + $0x70] sm:$0xff]
        %v1357 = vld [vmem:[%s1341 + $0x78] sm:$0xff]
        %v1358 = vld [vmem:[%s1341 + $0x80] sm:$0xff]
        %v1359 = vld [vmem:[%s1341 + $0x88] sm:$0xff]
        %v1360 = vld [vmem:[%s1341 + $0x90] sm:$0xff]
        %v1361 = vld [vmem:[%s1341 + $0x98] sm:$0xff]
        %v1362 = vld [vmem:[%s1341 + $0xa0] sm:$0xff]
        %v1363 = vld [vmem:[%s1341 + $0xa8] sm:$0xff]
        %v1364 = vld [vmem:[%s1341 + $0xb0] sm:$0xff]
        %v1365 = vld [vmem:[%s1341 + $0xb8] sm:$0xff]
        %v1390 = vrot.slane %v1342, 1
        %v1391 = vrot.slane %v1343, 1
        %v1392 = vsel %vm293, %v1390, %v1391
        %v1393 = vrot.slane %v1344, 1
        %v1394 = vsel %vm293, %v1391, %v1393
        %v1395 = vrot.slane %v1345, 1
        %v1396 = vrot.slane %v1346, 1
        %v1397 = vsel %vm293, %v1395, %v1396
        %v1398 = vrot.slane %v1347, 1
        %v1399 = vsel %vm293, %v1396, %v1398
        %v1400 = vrot.slane %v1348, 1
        %v1401 = vrot.slane %v1349, 1
        %v1402 = vsel %vm293, %v1400, %v1401
        %v1403 = vrot.slane %v1350, 1
        %v1404 = vsel %vm293, %v1401, %v1403
        %v1405 = vrot.slane %v1351, 1
        %v1406 = vrot.slane %v1352, 1
        %v1407 = vsel %vm293, %v1405, %v1406
        %v1408 = vrot.slane %v1353, 1
        %v1409 = vsel %vm293, %v1406, %v1408
        %v1410 = vrot.slane %v1354, 1
        %v1411 = vrot.slane %v1355, 1
        %v1412 = vsel %vm293, %v1410, %v1411
        %v1413 = vrot.slane %v1356, 1
        %v1414 = vsel %vm293, %v1411, %v1413
        %v1415 = vrot.slane %v1357, 1
        %v1416 = vrot.slane %v1358, 1
        %v1417 = vsel %vm293, %v1415, %v1416
        %v1418 = vrot.slane %v1359, 1
        %v1419 = vsel %vm293, %v1416, %v1418
        %v1420 = vrot.slane %v1360, 1
        %v1421 = vrot.slane %v1361, 1
        %v1422 = vsel %vm293, %v1420, %v1421
        %v1423 = vrot.slane %v1362, 1
        %v1424 = vsel %vm293, %v1421, %v1423
        %v1425 = vrot.slane %v1363, 1
        %v1426 = vrot.slane %v1364, 1
        %v1427 = vsel %vm293, %v1425, %v1426
        %v1428 = vrot.slane %v1365, 1
        %v1429 = vsel %vm293, %v1426, %v1428
        %v1446 = vrot.slane %v1342, 2
        %v1447 = vrot.slane %v1343, 2
        %v1448 = vsel %vm350, %v1446, %v1447
        %v1449 = vrot.slane %v1344, 2
        %v1450 = vsel %vm350, %v1447, %v1449
        %v1451 = vrot.slane %v1345, 2
        %v1452 = vrot.slane %v1346, 2
        %v1453 = vsel %vm350, %v1451, %v1452
        %v1454 = vrot.slane %v1347, 2
        %v1455 = vsel %vm350, %v1452, %v1454
        %v1456 = vrot.slane %v1348, 2
        %v1457 = vrot.slane %v1349, 2
        %v1458 = vsel %vm350, %v1456, %v1457
        %v1459 = vrot.slane %v1350, 2
        %v1460 = vsel %vm350, %v1457, %v1459
        %v1461 = vrot.slane %v1351, 2
        %v1462 = vrot.slane %v1352, 2
        %v1463 = vsel %vm350, %v1461, %v1462
        %v1464 = vrot.slane %v1353, 2
        %v1465 = vsel %vm350, %v1462, %v1464
        %v1466 = vrot.slane %v1354, 2
        %v1467 = vrot.slane %v1355, 2
        %v1468 = vsel %vm350, %v1466, %v1467
        %v1469 = vrot.slane %v1356, 2
        %v1470 = vsel %vm350, %v1467, %v1469
        %v1471 = vrot.slane %v1357, 2
        %v1472 = vrot.slane %v1358, 2
        %v1473 = vsel %vm350, %v1471, %v1472
        %v1474 = vrot.slane %v1359, 2
        %v1475 = vsel %vm350, %v1472, %v1474
        %v1476 = vrot.slane %v1360, 2
        %v1477 = vrot.slane %v1361, 2
        %v1478 = vsel %vm350, %v1476, %v1477
        %v1479 = vrot.slane %v1362, 2
        %v1480 = vsel %vm350, %v1477, %v1479
        %v1481 = vrot.slane %v1363, 2
        %v1482 = vrot.slane %v1364, 2
        %v1483 = vsel %vm350, %v1481, %v1482
        %v1484 = vrot.slane %v1365, 2
        %v1485 = vsel %vm350, %v1482, %v1484
        %v1502 = vld [vmem:[#allocation2] sm:$0xff]
        %v1503 = vld [vmem:[#allocation2 + $0x8] sm:$0xff]
        %v1504 = vld [vmem:[#allocation2 + $0x10] sm:$0xff]
        %v1505 = vld [vmem:[#allocation2 + $0x18] sm:$0xff]
        %v1506 = vld [vmem:[#allocation2 + $0x20] sm:$0xff]
        %v1507 = vld [vmem:[#allocation2 + $0x28] sm:$0xff]
        %v1508 = vld [vmem:[#allocation2 + $0x30] sm:$0xff]
        %v1509 = vld [vmem:[#allocation2 + $0x38] sm:$0xff]
        %v1510 = vld [vmem:[#allocation2 + $0x40] sm:$0xff]
        %v1511 = vld [vmem:[#allocation2 + $0x48] sm:$0xff]
        %v1512 = vld [vmem:[#allocation2 + $0x50] sm:$0xff]
        %v1513 = vld [vmem:[#allocation2 + $0x58] sm:$0xff]
        %v1514 = vld [vmem:[#allocation2 + $0x60] sm:$0xff]
        %v1515 = vld [vmem:[#allocation2 + $0x68] sm:$0xff]
        %v1516 = vld [vmem:[#allocation2 + $0x70] sm:$0xff]
        %v1517 = vld [vmem:[#allocation2 + $0x78] sm:$0xff]
        %s1518 = scalar_lea.vmem [#allocation6], 768
        %v1519 = vld [vmem:[%s1518] sm:$0xff]
        %v1520 = vld [vmem:[%s1518 + $0x8] sm:$0xff]
        %v1521 = vld [vmem:[%s1518 + $0x10] sm:$0xff]
        %v1522 = vld [vmem:[%s1518 + $0x18] sm:$0xff]
        %v1523 = vld [vmem:[%s1518 + $0x20] sm:$0xff]
        %v1524 = vld [vmem:[%s1518 + $0x28] sm:$0xff]
        %v1525 = vld [vmem:[%s1518 + $0x30] sm:$0xff]
        %v1526 = vld [vmem:[%s1518 + $0x38] sm:$0xff]
        %v1527 = vld [vmem:[%s1518 + $0x40] sm:$0xff]
        %v1528 = vld [vmem:[%s1518 + $0x48] sm:$0xff]
        %v1529 = vld [vmem:[%s1518 + $0x50] sm:$0xff]
        %v1530 = vld [vmem:[%s1518 + $0x58] sm:$0xff]
        %v1531 = vld [vmem:[%s1518 + $0x60] sm:$0xff]
        %v1532 = vld [vmem:[%s1518 + $0x68] sm:$0xff]
        %v1533 = vld [vmem:[%s1518 + $0x70] sm:$0xff]
        %v1534 = vld [vmem:[%s1518 + $0x78] sm:$0xff]
        %v1535 = vld [vmem:[%s1518 + $0x80] sm:$0xff]
        %v1536 = vld [vmem:[%s1518 + $0x88] sm:$0xff]
        %v1537 = vld [vmem:[%s1518 + $0x90] sm:$0xff]
        %v1538 = vld [vmem:[%s1518 + $0x98] sm:$0xff]
        %v1539 = vld [vmem:[%s1518 + $0xa0] sm:$0xff]
        %v1540 = vld [vmem:[%s1518 + $0xa8] sm:$0xff]
        %v1541 = vld [vmem:[%s1518 + $0xb0] sm:$0xff]
        %v1542 = vld [vmem:[%s1518 + $0xb8] sm:$0xff]
        %v1543 = vld [vmem:[%s1518 + $0xc0] sm:$0xff]
        %v1544 = vld [vmem:[%s1518 + $0xc8] sm:$0xff]
        %v1545 = vld [vmem:[%s1518 + $0xd0] sm:$0xff]
        %v1546 = vld [vmem:[%s1518 + $0xd8] sm:$0xff]
        %v1547 = vld [vmem:[%s1518 + $0xe0] sm:$0xff]
        %v1548 = vld [vmem:[%s1518 + $0xe8] sm:$0xff]
        %v1549 = vld [vmem:[%s1518 + $0xf0] sm:$0xff]
        %v1550 = vld [vmem:[%s1518 + $0xf8] sm:$0xff]
        %v1551 = vld [vmem:[%s1518 + $0x100] sm:$0xff]
        %v1552 = vld [vmem:[%s1518 + $0x108] sm:$0xff]
        %v1553 = vld [vmem:[%s1518 + $0x110] sm:$0xff]
        %v1554 = vld [vmem:[%s1518 + $0x118] sm:$0xff]
        %v1555 = vld [vmem:[%s1518 + $0x120] sm:$0xff]
        %v1556 = vld [vmem:[%s1518 + $0x128] sm:$0xff]
        %v1557 = vld [vmem:[%s1518 + $0x130] sm:$0xff]
        %v1558 = vld [vmem:[%s1518 + $0x138] sm:$0xff]
        %v1559 = vld [vmem:[%s1518 + $0x140] sm:$0xff]
        %v1560 = vld [vmem:[%s1518 + $0x148] sm:$0xff]
        %v1561 = vld [vmem:[%s1518 + $0x150] sm:$0xff]
        %v1562 = vld [vmem:[%s1518 + $0x158] sm:$0xff]
        %v1563 = vld [vmem:[%s1518 + $0x160] sm:$0xff]
        %v1564 = vld [vmem:[%s1518 + $0x168] sm:$0xff]
        %v1565 = vld [vmem:[%s1518 + $0x170] sm:$0xff]
        %v1566 = vld [vmem:[%s1518 + $0x178] sm:$0xff]
        %1567 = vmatprep.subr.mxu0 0.0
        %1568 = vmatpush1.msra.mxu0 %v1534
        %1569 = vmatprep.subr.mxu0 0.0
        %1570 = vmatpush1.msra.mxu0 %v1533
        %1571 = vmatprep.subr.mxu0 0.0
        %1572 = vmatpush1.msra.mxu0 %v1532
        %1573 = vmatprep.subr.mxu0 0.0
        %1574 = vmatpush1.msra.mxu0 %v1531
        %1575 = vmatprep.subr.mxu0 0.0
        %1576 = vmatpush1.msra.mxu0 %v1530
        %1577 = vmatprep.subr.mxu0 0.0
        %1578 = vmatpush1.msra.mxu0 %v1529
        %1579 = vmatprep.subr.mxu0 0.0
        %1580 = vmatpush1.msra.mxu0 %v1528
        %1581 = vmatprep.subr.mxu0 0.0
        %1582 = vmatpush1.msra.mxu0 %v1527
        %1583 = vmatprep.subr.mxu0 0.0
        %1584 = vmatpush1.msra.mxu0 %v1526
        %1585 = vmatprep.subr.mxu0 0.0
        %1586 = vmatpush1.msra.mxu0 %v1525
        %1587 = vmatprep.subr.mxu0 0.0
        %1588 = vmatpush1.msra.mxu0 %v1524
        %1589 = vmatprep.subr.mxu0 0.0
        %1590 = vmatpush1.msra.mxu0 %v1523
        %1591 = vmatprep.subr.mxu0 0.0
        %1592 = vmatpush1.msra.mxu0 %v1522
        %1593 = vmatprep.subr.mxu0 0.0
        %1594 = vmatpush1.msra.mxu0 %v1521
        %1595 = vmatprep.subr.mxu0 0.0
        %1596 = vmatpush1.msra.mxu0 %v1520
        %1597 = vmatprep.subr.mxu0 0.0
        %1598 = vmatpush1.msra.mxu0 %v1519
        %1599 = vmatprep.subr.mxu0 0.0
        %1600 = vmatpush2.msra.mxu0 %v1550
        %1601 = vmatprep.subr.mxu0 0.0
        %1602 = vmatpush2.msra.mxu0 %v1549
        %1603 = vmatprep.subr.mxu0 0.0
        %1604 = vmatpush2.msra.mxu0 %v1548
        %1605 = vmatprep.subr.mxu0 0.0
        %1606 = vmatpush2.msra.mxu0 %v1547
        %1607 = vmatprep.subr.mxu0 0.0
        %1608 = vmatpush2.msra.mxu0 %v1546
        %1609 = vmatprep.subr.mxu0 0.0
        %1610 = vmatpush2.msra.mxu0 %v1545
        %1611 = vmatprep.subr.mxu0 0.0
        %1612 = vmatpush2.msra.mxu0 %v1544
        %1613 = vmatprep.subr.mxu0 0.0
        %1614 = vmatpush2.msra.mxu0 %v1543
        %1615 = vmatprep.subr.mxu0 0.0
        %1616 = vmatpush2.msra.mxu0 %v1542
        %1617 = vmatprep.subr.mxu0 0.0
        %1618 = vmatpush2.msra.mxu0 %v1541
        %1619 = vmatprep.subr.mxu0 0.0
        %1620 = vmatpush2.msra.mxu0 %v1540
        %1621 = vmatprep.subr.mxu0 0.0
        %1622 = vmatpush2.msra.mxu0 %v1539
        %1623 = vmatprep.subr.mxu0 0.0
        %1624 = vmatpush2.msra.mxu0 %v1538
        %1625 = vmatprep.subr.mxu0 0.0
        %1626 = vmatpush2.msra.mxu0 %v1537
        %1627 = vmatprep.subr.mxu0 0.0
        %1628 = vmatpush2.msra.mxu0 %v1536
        %1629 = vmatprep.subr.mxu0 0.0
        %1630 = vmatpush2.msra.mxu0 %v1535
        %1631 = vmatprep.mubr.f32.mxu0 %v1392
        %1632 = vmatmul.mubr.f32.gmra.mxu0 %v1342
        %v1633 = vpop.f32.mrf.mxu0
        %v1634 = vadd.f32 0.0, %v1633
        %v1635 = vpop.f32.mrf.mxu0
        %1636 = vmatprep.mubr.f32.mxu0 %v1394
        %1637 = vmatmul.mubr.f32.gmra.mxu0 %v1343
        %v1638 = vpop.f32.mrf.mxu0
        %v1639 = vadd.f32 0.0, %v1638
        %v1640 = vpop.f32.mrf.mxu0
        %1641 = vmatprep.mubr.f32.mxu0 %v1397
        %1642 = vmatmul.mubr.f32.gmra.mxu0 %v1345
        %v1643 = vpop.f32.mrf.mxu0
        %v1644 = vadd.f32 0.0, %v1643
        %v1645 = vpop.f32.mrf.mxu0
        %1646 = vmatprep.mubr.f32.mxu0 %v1399
        %1647 = vmatmul.mubr.f32.gmra.mxu0 %v1346
        %v1648 = vpop.f32.mrf.mxu0
        %v1649 = vadd.f32 0.0, %v1648
        %v1650 = vpop.f32.mrf.mxu0
        %1651 = vmatprep.mubr.f32.mxu0 %v1402
        %1652 = vmatmul.mubr.f32.gmra.mxu0 %v1348
        %v1653 = vpop.f32.mrf.mxu0
        %v1654 = vadd.f32 0.0, %v1653
        %v1655 = vpop.f32.mrf.mxu0
        %1656 = vmatprep.mubr.f32.mxu0 %v1404
        %1657 = vmatmul.mubr.f32.gmra.mxu0 %v1349
        %v1658 = vpop.f32.mrf.mxu0
        %v1659 = vadd.f32 0.0, %v1658
        %v1660 = vpop.f32.mrf.mxu0
        %1661 = vmatprep.mubr.f32.mxu0 %v1407
        %1662 = vmatmul.mubr.f32.gmra.mxu0 %v1351
        %v1663 = vpop.f32.mrf.mxu0
        %v1664 = vadd.f32 0.0, %v1663
        %v1665 = vpop.f32.mrf.mxu0
        %1666 = vmatprep.mubr.f32.mxu0 %v1409
        %1667 = vmatmul.mubr.f32.gmra.mxu0 %v1352
        %v1668 = vpop.f32.mrf.mxu0
        %v1669 = vadd.f32 0.0, %v1668
        %v1670 = vpop.f32.mrf.mxu0
        %1671 = vmatprep.mubr.f32.mxu0 %v1412
        %1672 = vmatmul.mubr.f32.gmra.mxu0 %v1354
        %v1673 = vpop.f32.mrf.mxu0
        %v1674 = vadd.f32 0.0, %v1673
        %v1675 = vpop.f32.mrf.mxu0
        %1676 = vmatprep.mubr.f32.mxu0 %v1414
        %1677 = vmatmul.mubr.f32.gmra.mxu0 %v1355
        %v1678 = vpop.f32.mrf.mxu0
        %v1679 = vadd.f32 0.0, %v1678
        %v1680 = vpop.f32.mrf.mxu0
        %1681 = vmatprep.mubr.f32.mxu0 %v1417
        %1682 = vmatmul.mubr.f32.gmra.mxu0 %v1357
        %v1683 = vpop.f32.mrf.mxu0
        %v1684 = vadd.f32 0.0, %v1683
        %v1685 = vpop.f32.mrf.mxu0
        %1686 = vmatprep.mubr.f32.mxu0 %v1419
        %1687 = vmatmul.mubr.f32.gmra.mxu0 %v1358
        %v1688 = vpop.f32.mrf.mxu0
        %v1689 = vadd.f32 0.0, %v1688
        %v1690 = vpop.f32.mrf.mxu0
        %1691 = vmatprep.mubr.f32.mxu0 %v1422
        %1692 = vmatmul.mubr.f32.gmra.mxu0 %v1360
        %v1693 = vpop.f32.mrf.mxu0
        %v1694 = vadd.f32 0.0, %v1693
        %v1695 = vpop.f32.mrf.mxu0
        %1696 = vmatprep.mubr.f32.mxu0 %v1424
        %1697 = vmatmul.mubr.f32.gmra.mxu0 %v1361
        %v1698 = vpop.f32.mrf.mxu0
        %v1699 = vadd.f32 0.0, %v1698
        %v1700 = vpop.f32.mrf.mxu0
        %1701 = vmatprep.mubr.f32.mxu0 %v1427
        %1702 = vmatmul.mubr.f32.gmra.mxu0 %v1363
        %v1703 = vpop.f32.mrf.mxu0
        %v1704 = vadd.f32 0.0, %v1703
        %v1705 = vpop.f32.mrf.mxu0
        %1706 = vmatprep.mubr.f32.mxu0 %v1429
        %1707 = vmatmul.mubr.f32.gmra.mxu0 %v1364
        %v1708 = vpop.f32.mrf.mxu0
        %v1709 = vadd.f32 0.0, %v1708
        %v1710 = vpop.f32.mrf.mxu0
        %1711 = vdwg.mxu0
        %1712 = vmatprep.subr.mxu0 0.0
        %1713 = vmatpush1.msra.mxu0 %v1566
        %1714 = vmatprep.subr.mxu0 0.0
        %1715 = vmatpush1.msra.mxu0 %v1565
        %1716 = vmatprep.subr.mxu0 0.0
        %1717 = vmatpush1.msra.mxu0 %v1564
        %1718 = vmatprep.subr.mxu0 0.0
        %1719 = vmatpush1.msra.mxu0 %v1563
        %1720 = vmatprep.subr.mxu0 0.0
        %1721 = vmatpush1.msra.mxu0 %v1562
        %1722 = vmatprep.subr.mxu0 0.0
        %1723 = vmatpush1.msra.mxu0 %v1561
        %1724 = vmatprep.subr.mxu0 0.0
        %1725 = vmatpush1.msra.mxu0 %v1560
        %1726 = vmatprep.subr.mxu0 0.0
        %1727 = vmatpush1.msra.mxu0 %v1559
        %1728 = vmatprep.subr.mxu0 0.0
        %1729 = vmatpush1.msra.mxu0 %v1558
        %1730 = vmatprep.subr.mxu0 0.0
        %1731 = vmatpush1.msra.mxu0 %v1557
        %1732 = vmatprep.subr.mxu0 0.0
        %1733 = vmatpush1.msra.mxu0 %v1556
        %1734 = vmatprep.subr.mxu0 0.0
        %1735 = vmatpush1.msra.mxu0 %v1555
        %1736 = vmatprep.subr.mxu0 0.0
        %1737 = vmatpush1.msra.mxu0 %v1554
        %1738 = vmatprep.subr.mxu0 0.0
        %1739 = vmatpush1.msra.mxu0 %v1553
        %1740 = vmatprep.subr.mxu0 0.0
        %1741 = vmatpush1.msra.mxu0 %v1552
        %1742 = vmatprep.subr.mxu0 0.0
        %1743 = vmatpush1.msra.mxu0 %v1551
        %1744 = vmatprep.subr.mxu0 0.0
        %1745 = vmatpush2.msra.mxu0 0.0
        %1746 = vmatprep.subr.mxu0 0.0
        %1747 = vmatpush2.msra.mxu0 0.0
        %1748 = vmatprep.subr.mxu0 0.0
        %1749 = vmatpush2.msra.mxu0 0.0
        %1750 = vmatprep.subr.mxu0 0.0
        %1751 = vmatpush2.msra.mxu0 0.0
        %1752 = vmatprep.subr.mxu0 0.0
        %1753 = vmatpush2.msra.mxu0 0.0
        %1754 = vmatprep.subr.mxu0 0.0
        %1755 = vmatpush2.msra.mxu0 0.0
        %1756 = vmatprep.subr.mxu0 0.0
        %1757 = vmatpush2.msra.mxu0 0.0
        %1758 = vmatprep.subr.mxu0 0.0
        %1759 = vmatpush2.msra.mxu0 0.0
        %1760 = vmatprep.subr.mxu0 0.0
        %1761 = vmatpush2.msra.mxu0 0.0
        %1762 = vmatprep.subr.mxu0 0.0
        %1763 = vmatpush2.msra.mxu0 0.0
        %1764 = vmatprep.subr.mxu0 0.0
        %1765 = vmatpush2.msra.mxu0 0.0
        %1766 = vmatprep.subr.mxu0 0.0
        %1767 = vmatpush2.msra.mxu0 0.0
        %1768 = vmatprep.subr.mxu0 0.0
        %1769 = vmatpush2.msra.mxu0 0.0
        %1770 = vmatprep.subr.mxu0 0.0
        %1771 = vmatpush2.msra.mxu0 0.0
        %1772 = vmatprep.subr.mxu0 0.0
        %1773 = vmatpush2.msra.mxu0 0.0
        %1774 = vmatprep.subr.mxu0 0.0
        %1775 = vmatpush2.msra.mxu0 0.0
        %1776 = vmatprep.mubr.f32.mxu0 0.0
        %1777 = vmatmul.mubr.f32.gmra.mxu0 %v1448
        %v1778 = vpop.f32.mrf.mxu0
        %v1779 = vadd.f32 %v1634, %v1778
        %v1780 = vpop.f32.mrf.mxu0
        %1781 = vmatprep.mubr.f32.mxu0 0.0
        %1782 = vmatmul.mubr.f32.gmra.mxu0 %v1450
        %v1783 = vpop.f32.mrf.mxu0
        %v1784 = vadd.f32 %v1639, %v1783
        %v1785 = vpop.f32.mrf.mxu0
        %1786 = vmatprep.mubr.f32.mxu0 0.0
        %1787 = vmatmul.mubr.f32.gmra.mxu0 %v1453
        %v1788 = vpop.f32.mrf.mxu0
        %v1789 = vadd.f32 %v1644, %v1788
        %v1790 = vpop.f32.mrf.mxu0
        %1791 = vmatprep.mubr.f32.mxu0 0.0
        %1792 = vmatmul.mubr.f32.gmra.mxu0 %v1455
        %v1793 = vpop.f32.mrf.mxu0
        %v1794 = vadd.f32 %v1649, %v1793
        %v1795 = vpop.f32.mrf.mxu0
        %1796 = vmatprep.mubr.f32.mxu0 0.0
        %1797 = vmatmul.mubr.f32.gmra.mxu0 %v1458
        %v1798 = vpop.f32.mrf.mxu0
        %v1799 = vadd.f32 %v1654, %v1798
        %v1800 = vpop.f32.mrf.mxu0
        %1801 = vmatprep.mubr.f32.mxu0 0.0
        %1802 = vmatmul.mubr.f32.gmra.mxu0 %v1460
        %v1803 = vpop.f32.mrf.mxu0
        %v1804 = vadd.f32 %v1659, %v1803
        %v1805 = vpop.f32.mrf.mxu0
        %1806 = vmatprep.mubr.f32.mxu0 0.0
        %1807 = vmatmul.mubr.f32.gmra.mxu0 %v1463
        %v1808 = vpop.f32.mrf.mxu0
        %v1809 = vadd.f32 %v1664, %v1808
        %v1810 = vpop.f32.mrf.mxu0
        %1811 = vmatprep.mubr.f32.mxu0 0.0
        %1812 = vmatmul.mubr.f32.gmra.mxu0 %v1465
        %v1813 = vpop.f32.mrf.mxu0
        %v1814 = vadd.f32 %v1669, %v1813
        %v1815 = vpop.f32.mrf.mxu0
        %1816 = vmatprep.mubr.f32.mxu0 0.0
        %1817 = vmatmul.mubr.f32.gmra.mxu0 %v1468
        %v1818 = vpop.f32.mrf.mxu0
        %v1819 = vadd.f32 %v1674, %v1818
        %v1820 = vpop.f32.mrf.mxu0
        %1821 = vmatprep.mubr.f32.mxu0 0.0
        %1822 = vmatmul.mubr.f32.gmra.mxu0 %v1470
        %v1823 = vpop.f32.mrf.mxu0
        %v1824 = vadd.f32 %v1679, %v1823
        %v1825 = vpop.f32.mrf.mxu0
        %1826 = vmatprep.mubr.f32.mxu0 0.0
        %1827 = vmatmul.mubr.f32.gmra.mxu0 %v1473
        %v1828 = vpop.f32.mrf.mxu0
        %v1829 = vadd.f32 %v1684, %v1828
        %v1830 = vpop.f32.mrf.mxu0
        %1831 = vmatprep.mubr.f32.mxu0 0.0
        %1832 = vmatmul.mubr.f32.gmra.mxu0 %v1475
        %v1833 = vpop.f32.mrf.mxu0
        %v1834 = vadd.f32 %v1689, %v1833
        %v1835 = vpop.f32.mrf.mxu0
        %1836 = vmatprep.mubr.f32.mxu0 0.0
        %1837 = vmatmul.mubr.f32.gmra.mxu0 %v1478
        %v1838 = vpop.f32.mrf.mxu0
        %v1839 = vadd.f32 %v1694, %v1838
        %v1840 = vpop.f32.mrf.mxu0
        %1841 = vmatprep.mubr.f32.mxu0 0.0
        %1842 = vmatmul.mubr.f32.gmra.mxu0 %v1480
        %v1843 = vpop.f32.mrf.mxu0
        %v1844 = vadd.f32 %v1699, %v1843
        %v1845 = vpop.f32.mrf.mxu0
        %1846 = vmatprep.mubr.f32.mxu0 0.0
        %1847 = vmatmul.mubr.f32.gmra.mxu0 %v1483
        %v1848 = vpop.f32.mrf.mxu0
        %v1849 = vadd.f32 %v1704, %v1848
        %v1850 = vpop.f32.mrf.mxu0
        %1851 = vmatprep.mubr.f32.mxu0 0.0
        %1852 = vmatmul.mubr.f32.gmra.mxu0 %v1485
        %v1853 = vpop.f32.mrf.mxu0
        %v1854 = vadd.f32 %v1709, %v1853
        %v1855 = vpop.f32.mrf.mxu0
        %1856 = vdwg.mxu0
        %v1857 = vadd.f32 %v1502, %v1779
        %v1858 = vadd.f32 %v1503, %v1784
        %v1859 = vadd.f32 %v1504, %v1789
        %v1860 = vadd.f32 %v1505, %v1794
        %v1861 = vadd.f32 %v1506, %v1799
        %v1862 = vadd.f32 %v1507, %v1804
        %v1863 = vadd.f32 %v1508, %v1809
        %v1864 = vadd.f32 %v1509, %v1814
        %v1865 = vadd.f32 %v1510, %v1819
        %v1866 = vadd.f32 %v1511, %v1824
        %v1867 = vadd.f32 %v1512, %v1829
        %v1868 = vadd.f32 %v1513, %v1834
        %v1869 = vadd.f32 %v1514, %v1839
        %v1870 = vadd.f32 %v1515, %v1844
        %v1871 = vadd.f32 %v1516, %v1849
        %v1872 = vadd.f32 %v1517, %v1854
        %1873 = vst [vmem:[#allocation2] sm:$0xff] %v1857
        %1874 = vst [vmem:[#allocation2 + $0x8] sm:$0xff] %v1858
        %1875 = vst [vmem:[#allocation2 + $0x10] sm:$0xff] %v1859
        %1876 = vst [vmem:[#allocation2 + $0x18] sm:$0xff] %v1860
        %1877 = vst [vmem:[#allocation2 + $0x20] sm:$0xff] %v1861
        %1878 = vst [vmem:[#allocation2 + $0x28] sm:$0xff] %v1862
        %1879 = vst [vmem:[#allocation2 + $0x30] sm:$0xff] %v1863
        %1880 = vst [vmem:[#allocation2 + $0x38] sm:$0xff] %v1864
        %1881 = vst [vmem:[#allocation2 + $0x40] sm:$0xff] %v1865
        %1882 = vst [vmem:[#allocation2 + $0x48] sm:$0xff] %v1866
        %1883 = vst [vmem:[#allocation2 + $0x50] sm:$0xff] %v1867
        %1884 = vst [vmem:[#allocation2 + $0x58] sm:$0xff] %v1868
        %1885 = vst [vmem:[#allocation2 + $0x60] sm:$0xff] %v1869
        %1886 = vst [vmem:[#allocation2 + $0x68] sm:$0xff] %v1870
        %1887 = vst [vmem:[#allocation2 + $0x70] sm:$0xff] %v1871
        %1888 = vst [vmem:[#allocation2 + $0x78] sm:$0xff] %v1872
        %v1889 = vld [vmem:[#allocation2] sm:$0xff]
        %v1890 = vld [vmem:[#allocation2 + $0x8] sm:$0xff]
        %v1891 = vld [vmem:[#allocation2 + $0x10] sm:$0xff]
        %v1892 = vld [vmem:[#allocation2 + $0x18] sm:$0xff]
        %v1893 = vld [vmem:[#allocation2 + $0x20] sm:$0xff]
        %v1894 = vld [vmem:[#allocation2 + $0x28] sm:$0xff]
        %v1895 = vld [vmem:[#allocation2 + $0x30] sm:$0xff]
        %v1896 = vld [vmem:[#allocation2 + $0x38] sm:$0xff]
        %v1897 = vld [vmem:[#allocation2 + $0x40] sm:$0xff]
        %v1898 = vld [vmem:[#allocation2 + $0x48] sm:$0xff]
        %v1899 = vld [vmem:[#allocation2 + $0x50] sm:$0xff]
        %v1900 = vld [vmem:[#allocation2 + $0x58] sm:$0xff]
        %v1901 = vld [vmem:[#allocation2 + $0x60] sm:$0xff]
        %v1902 = vld [vmem:[#allocation2 + $0x68] sm:$0xff]
        %v1903 = vld [vmem:[#allocation2 + $0x70] sm:$0xff]
        %v1904 = vld [vmem:[#allocation2 + $0x78] sm:$0xff]
        %v1905 = vmax.f32 %v1889, 0.0
        %v1906 = vmax.f32 %v1890, 0.0
        %v1907 = vmax.f32 %v1891, 0.0
        %v1908 = vmax.f32 %v1892, 0.0
        %v1909 = vmax.f32 %v1893, 0.0
        %v1910 = vmax.f32 %v1894, 0.0
        %v1911 = vmax.f32 %v1895, 0.0
        %v1912 = vmax.f32 %v1896, 0.0
        %v1913 = vmax.f32 %v1897, 0.0
        %v1914 = vmax.f32 %v1898, 0.0
        %v1915 = vmax.f32 %v1899, 0.0
        %v1916 = vmax.f32 %v1900, 0.0
        %v1917 = vmax.f32 %v1901, 0.0
        %v1918 = vmax.f32 %v1902, 0.0
        %v1919 = vmax.f32 %v1903, 0.0
        %v1920 = vmax.f32 %v1904, 0.0
        %1921 = vst [vmem:[%s221] sm:$0xff] %v1905
        %1922 = vst [vmem:[%s221 + $0x8] sm:$0xff] %v1906
        %1923 = vst [vmem:[%s221 + $0x10] sm:$0xff] %v1907
        %1924 = vst [vmem:[%s221 + $0x18] sm:$0xff] %v1908
        %1925 = vst [vmem:[%s221 + $0x20] sm:$0xff] %v1909
        %1926 = vst [vmem:[%s221 + $0x28] sm:$0xff] %v1910
        %1927 = vst [vmem:[%s221 + $0x30] sm:$0xff] %v1911
        %1928 = vst [vmem:[%s221 + $0x38] sm:$0xff] %v1912
        %1929 = vst [vmem:[%s221 + $0x40] sm:$0xff] %v1913
        %1930 = vst [vmem:[%s221 + $0x48] sm:$0xff] %v1914
        %1931 = vst [vmem:[%s221 + $0x50] sm:$0xff] %v1915
        %1932 = vst [vmem:[%s221 + $0x58] sm:$0xff] %v1916
        %1933 = vst [vmem:[%s221 + $0x60] sm:$0xff] %v1917
        %1934 = vst [vmem:[%s221 + $0x68] sm:$0xff] %v1918
        %1935 = vst [vmem:[%s221 + $0x70] sm:$0xff] %v1919
        %1936 = vst [vmem:[%s221 + $0x78] sm:$0xff] %v1920
        %s1937 = sand.u32 %s113, 1
        %s1938 = scalar_lea.sflag [#allocation5], %s1937
        %s1939 = sand.u32 %s113, 1
        %s1940 = smul.addr %s1939, 128
        %s1941 = scalar_lea.vmem [#allocation8], %s1940
        // Predicated region
        $region41: #{tpu_custom_call.1} parent=31 // pred_check
          %p1942 = pneg %p123
        $region42: #{tpu_custom_call.1} parent=31 // pred_check_branch
          %1944 = sbr.rel (%p1942) target = $region44
        $region43: #{tpu_custom_call.1} parent=31 // pred_region
          %s1946 = ssub.s32 2048, 2048
          %1947 = vsyncadd %s1938, %s1946
          %s1948 = smul.addr %s26, 16
          %s1949 = smul.addr %s25, 32
          %s1950 = sadd.s32 %s1948, %s1949
          %s1951 = smul.addr %s1950, 128
          %s1952 = scalar_lea.hbm %s3, %s1951
          %s1953 = sshll.u32 %s1941, 4
          %s1954 = int_to_ptr.vmem [resolvable:$true] %s1953
          %1959 = dma.vmem_to_hbm [thread:$0]  %s1954, 2048, %s1952, %s1938, 128, 128, 8
        $region44: #{tpu_custom_call.1} parent=31 // pred_fallthru
          _
      $region32: #{tpu_custom_call.1} parent=5 // pred_fallthru
        _
      %p1960 = scmp.le.s32.totalorder 2, %s16
      // Predicated region
      $region45: #{tpu_custom_call.1} parent=5 // pred_check
        %p1961 = pneg %p1960
      $region46: #{tpu_custom_call.1} parent=5 // pred_check_branch
        %1963 = sbr.rel (%p1961) target = $region48
      $region47: #{tpu_custom_call.1} parent=5 // pred_region
        %s1964 = ssub.s32 %s16, 2
        // Predicated region
        $region49: #{tpu_custom_call.1} parent=47 // pred_check
          %p1965 = pneg %p129
        $region50: #{tpu_custom_call.1} parent=47 // pred_check_branch
          %1967 = sbr.rel (%p1965) target = $region52
        $region51: #{tpu_custom_call.1} parent=47 // pred_region
          %s1968 = sand.u32 %s114, 1
          %s1969 = scalar_lea.sflag [#allocation5], %s1968
          %s1970 = sand.u32 %s114, 1
          %s1971 = smul.addr %s1970, 128
          %s1972 = scalar_lea.vmem [#allocation8], %s1971
          %1973 = dma.done %s1969, 2048
        $region52: #{tpu_custom_call.1} parent=47 // pred_fallthru
          _
      $region48: #{tpu_custom_call.1} parent=5 // pred_fallthru
        _
    $region6: #{tpu_custom_call.1} parent=1 // loop_footer
      %s20 = sadd.s32 1, %s16
    $region7: #{tpu_custom_call.1} parent=1 // loop_footer_branch
      %15 = sbr.rel target = $region3
    $region8: #{tpu_custom_call.1} parent=1 // loop_exit
      _
    %1974 = vsyncpa [#allocation4], 1
    %s1975 = scalar_lea.sflag [#allocation4], 1
    %1976 = vsyncpa %s1975, 1
    %1977 = vsyncpa [#allocation7], 1
    %1978 = vsyncpa [#allocation5], 1
    %s1979 = scalar_lea.sflag [#allocation5], 1
    %1980 = vsyncpa %s1979, 1

</llo_original>
